<compile_context>
chip_gen: v6e
topology: v6e:2x2x1
jax: 0.10.0
libtpu: 0.0.40
codegen_flags: <defaults>
</compile_context>

<pallas_src>
import jax
import jax.numpy as jnp
from jax.experimental import pallas as pl
from jax.experimental.pallas import tpu as pltpu

BN_EPS = 1e-5


def attention_pooler_kernel(h_ref, m_ref, w1_ref, b1_ref, w2_ref, b2_ref,
                            we_ref, be_ref, bn_scale_ref, bn_shift_ref, o_ref):
    B_BLK, S, H = h_ref.shape

    h2d = h_ref[...].reshape(B_BLK * S, H)                 # (B_BLK*S, H) f32

    # self.att[0:2]: Linear(H, H) + ReLU  -- bf16 MXU operands, f32 accumulation.
    h1 = jnp.dot(h2d.astype(jnp.bfloat16), w1_ref[...],
                 preferred_element_type=jnp.float32) + b1_ref[...]
    h1 = jnp.maximum(h1, 0.0)                              # (B_BLK*S, H) f32
    # self.att[2]: Dropout(p) is the identity in eval mode.

    # self.att[3]: Linear(H, 1) as a VPU broadcast-mul + lane reduction over H,
    # giving a lane-major (B_BLK, S) score block for the softmax.
    score = jnp.sum(h1.reshape(B_BLK, S, H) * w2_ref[...], axis=-1)
    score = score + b2_ref[...] + m_ref[...]               # (B_BLK, S)

    # softmax over the sequence (lane) axis.
    score = score - jnp.max(score, axis=-1, keepdims=True)
    e = jnp.exp(score)                                     # (B_BLK, S)
    # NOTE: approx=True would route this to the EUP; kept exact here so the
    # demo's tight tolerance vs. the f32 reference holds on every generation.
    inv_denom = pl.reciprocal(jnp.sum(e, axis=-1, keepdims=True), approx=False)
    p = e * inv_denom                                      # (B_BLK, S) probs

    # pooled = softmax(score) @ hidden_states, as a single MXU matmul per block:
    # block-diagonal (B_BLK, B_BLK*S) probabilities times the shared
    # (B_BLK*S, H) activation slab.
    BS = B_BLK * S
    row = jax.lax.broadcasted_iota(jnp.int32, (B_BLK, BS), 0)
    col = jax.lax.broadcasted_iota(jnp.int32, (B_BLK, BS), 1)
    in_band = (col >= row * S) & (col < row * S + S)
    p_tiled = jnp.tile(p, (1, B_BLK))                      # [r, c] == p[r, c % S]
    p_wide = jnp.where(in_band, p_tiled, 0.0)              # block-diagonal
    pooled = jnp.dot(p_wide, h2d, preferred_element_type=jnp.float32)

    # self.embed: Linear(H, O) + folded eval-mode BatchNorm1d affine.
    out = jnp.dot(pooled.astype(jnp.bfloat16), we_ref[...],
                  preferred_element_type=jnp.float32) + be_ref[...]
    out = out * bn_scale_ref[...] + bn_shift_ref[...]
    o_ref[...] = out.astype(o_ref.dtype)                   # lane-dense (B_BLK, O)


def _pick_batch_block(B, S):
    """Divisor of B, sublane-friendly (multiple of 8 or the full batch),
    targeting ~256 fused rows (B_BLK*S) per grid step."""
    target = max(1, 256 // max(S, 1))
    cands = [d for d in range(1, B + 1)
             if B % d == 0 and (d % 8 == 0 or d == B)]
    return min(cands, key=lambda d: (abs(d - target), d))


def attention_pooler(hidden_states, masks, params, *, b_blk=None):
    B, S, H = hidden_states.shape
    O = params["we_t"].shape[1]
    if b_blk is None:
        b_blk = _pick_batch_block(B, S)
    assert B % b_blk == 0 and (b_blk % 8 == 0 or b_blk == B)

    masks = masks.reshape(B, S).astype(jnp.float32)

    # Fold eval-mode BatchNorm1d (running stats) into one affine.
    bn_scale = params["gamma"] * jax.lax.rsqrt(params["var"] + BN_EPS)
    bn_shift = params["beta"] - params["mean"] * bn_scale

    weights = [params["w1_t"], params["b1"], params["w2_row"], params["b2"],
               params["we_t"], params["be"], bn_scale, bn_shift]

    # TODO(synk): for very large H on v7x (64 MiB VMEM), single-buffer these
    # constants (pipeline_mode=pl.Buffered(1)) and K-tile w1_t with an
    # "arbitrary" contraction grid axis + f32 VMEM accumulator.
    def const_spec(arr):
        zeros = (0,) * arr.ndim
        return pl.BlockSpec(arr.shape, lambda b, z=zeros: z)

    out = pl.pallas_call(
        attention_pooler_kernel,
        out_shape=jax.ShapeDtypeStruct((B, O), jnp.float32),
        grid_spec=pltpu.PrefetchScalarGridSpec(
            num_scalar_prefetch=0,
            grid=(B // b_blk,),
            in_specs=[pl.BlockSpec((b_blk, S, H), lambda b: (b, 0, 0)),
                      pl.BlockSpec((b_blk, S), lambda b: (b, 0))]
                     + [const_spec(w) for w in weights],
            out_specs=pl.BlockSpec((b_blk, O), lambda b: (b, 0)),
        ),
        compiler_params=pltpu.CompilerParams(
            # batch-block axis is independent -> megacore-shardable on v7x.
            dimension_semantics=("parallel",),
            # headroom for larger resident tiles (v5e default 16 MiB, v6e 32 MiB);
            # actual usage at these shapes is far below this.
            vmem_limit_bytes=64 * 1024 * 1024,
        ),
    )(hidden_states, masks, *weights)
    return out


def init_params(key, hidden_size, output_size):
    k1, k2, k3, k4, k5, k6 = jax.random.split(key, 6)

    def lin_init(kw, kb, fan_in, fan_out):
        bound = 1.0 / (fan_in ** 0.5)
        w = jax.random.uniform(kw, (fan_out, fan_in), jnp.float32, -bound, bound)
        b = jax.random.uniform(kb, (fan_out,), jnp.float32, -bound, bound)
        return w, b

    w1, b1 = lin_init(k1, k2, hidden_size, hidden_size)   # att[0]
    w2, b2 = lin_init(k3, k4, hidden_size, 1)             # att[3]
    we, be = lin_init(k5, k6, hidden_size, output_size)   # embed

    return dict(
        # MXU weights stored pre-transposed in bf16 (f32 accumulation in-kernel).
        w1_t=w1.T.astype(jnp.bfloat16), b1=b1.reshape(1, hidden_size),
        w2_row=w2.reshape(1, hidden_size),   # Linear(H,1) weight as an f32 row
        b2=b2.reshape(1, 1),
        we_t=we.T.astype(jnp.bfloat16), be=be.reshape(1, output_size),
        gamma=jnp.ones((1, output_size), jnp.float32),
        beta=jnp.zeros((1, output_size), jnp.float32),
        mean=jnp.zeros((1, output_size), jnp.float32),
        var=jnp.ones((1, output_size), jnp.float32),
    )


def reference(hidden_states, masks, params):
    """Pure-JAX forward with the same precision policy (bf16 MXU operands, f32 acc)."""
    h1 = jnp.dot(hidden_states.astype(jnp.bfloat16), params["w1_t"],
                 preferred_element_type=jnp.float32) + params["b1"][0]
    h1 = jnp.maximum(h1, 0.0)                                        # (B,S,H) f32
    score = jnp.sum(h1 * params["w2_row"][0], axis=-1) + params["b2"][0, 0]
    score = score + masks
    p = jax.nn.softmax(score, axis=-1)                               # (B,S)
    pooled = jnp.einsum("bs,bsh->bh", p, hidden_states)              # f32
    out = jnp.dot(pooled.astype(jnp.bfloat16), params["we_t"],
                  preferred_element_type=jnp.float32) + params["be"][0]
    out = ((out - params["mean"][0])
           * jax.lax.rsqrt(params["var"][0] + BN_EPS)
           * params["gamma"][0] + params["beta"][0])
    return out


if __name__ == "__main__":
    B, S, H, O = 16, 32, 128, 128
    key = jax.random.PRNGKey(0)
    kp, kx, km = jax.random.split(key, 3)

    params = init_params(kp, H, O)
    hidden_states = jax.random.normal(kx, (B, S, H), jnp.float32)
    # additive attention mask (0 = keep, -1e4 = masked)
    keep = (jax.random.uniform(km, (B, S)) > 0.3).astype(jnp.float32)
    masks = (1.0 - keep) * (-1e4)

    out = jax.block_until_ready(attention_pooler(hidden_states, masks, params))
    ref = reference(hidden_states, masks, params)

    assert out.shape == (B, O)
    max_err = float(jnp.max(jnp.abs(out - ref)))
    assert jnp.allclose(out, ref, atol=2e-3, rtol=2e-3), f"max |err| = {max_err}"
    print("KERNEL_OK")
</pallas_src>

<mosaic_0001>
module attributes {stable_mosaic.version = 11 : i64} {
  func.func @attention_pooler_kernel(%arg0: i32, %arg1: memref<8x32x128xf32, #tpu.memory_space<vmem>>, %arg2: memref<8x32xf32, #tpu.memory_space<vmem>>, %arg3: memref<128x128xbf16, #tpu.memory_space<vmem>>, %arg4: memref<1x128xf32, #tpu.memory_space<vmem>>, %arg5: memref<1x128xf32, #tpu.memory_space<vmem>>, %arg6: memref<1x1xf32, #tpu.memory_space<vmem>>, %arg7: memref<128x128xbf16, #tpu.memory_space<vmem>>, %arg8: memref<1x128xf32, #tpu.memory_space<vmem>>, %arg9: memref<1x128xf32, #tpu.memory_space<vmem>>, %arg10: memref<1x128xf32, #tpu.memory_space<vmem>>, %arg11: memref<8x128xf32, #tpu.memory_space<vmem>>) attributes {dimension_semantics = [#tpu.dimension_semantics<parallel>], iteration_bounds = array<i64: 2>, scalar_prefetch = 0 : i64, scratch_operands = 0 : i64, tpu.core_type = #tpu.core_type<tc>, window_params = [{transform_indices = @transform_0, window_bounds = array<i64: 8, 32, 128>}, {transform_indices = @transform_1, window_bounds = array<i64: 8, 32>}, {pipeline_mode = #tpu.pipeline_mode<synchronous>, transform_indices = @transform_2, window_bounds = array<i64: 128, 128>}, {pipeline_mode = #tpu.pipeline_mode<synchronous>, transform_indices = @transform_3, window_bounds = array<i64: 1, 128>}, {pipeline_mode = #tpu.pipeline_mode<synchronous>, transform_indices = @transform_4, window_bounds = array<i64: 1, 128>}, {pipeline_mode = #tpu.pipeline_mode<synchronous>, transform_indices = @transform_5, window_bounds = array<i64: 1, 1>}, {pipeline_mode = #tpu.pipeline_mode<synchronous>, transform_indices = @transform_6, window_bounds = array<i64: 128, 128>}, {pipeline_mode = #tpu.pipeline_mode<synchronous>, transform_indices = @transform_7, window_bounds = array<i64: 1, 128>}, {pipeline_mode = #tpu.pipeline_mode<synchronous>, transform_indices = @transform_8, window_bounds = array<i64: 1, 128>}, {pipeline_mode = #tpu.pipeline_mode<synchronous>, transform_indices = @transform_9, window_bounds = array<i64: 1, 128>}, {transform_indices = @transform_10, window_bounds = array<i64: 8, 128>}]} {
    %c0 = arith.constant 0 : index
    %c0_0 = arith.constant 0 : index
    %c0_1 = arith.constant 0 : index
    %0 = vector.load %arg1[%c0, %c0_0, %c0_1] : memref<8x32x128xf32, #tpu.memory_space<vmem>>, vector<8x32x128xf32>
    %1 = vector.shape_cast %0 : vector<8x32x128xf32> to vector<256x128xf32>
    %2 = arith.truncf %1 : vector<256x128xf32> to vector<256x128xbf16>
    %c0_2 = arith.constant 0 : index
    %c0_3 = arith.constant 0 : index
    %3 = vector.load %arg3[%c0_2, %c0_3] : memref<128x128xbf16, #tpu.memory_space<vmem>>, vector<128x128xbf16>
    %cst = arith.constant dense<0.000000e+00> : vector<256x128xf32>
    %4 = tpu.matmul %2, %3, %cst {dimension_numbers = #tpu.dot_dimension_numbers<[1], [0], [0], [1], [0, 0, 1, 1], [], []>} : vector<256x128xbf16>, vector<128x128xbf16>, vector<256x128xf32> -> vector<256x128xf32>
    %c0_4 = arith.constant 0 : index
    %c0_5 = arith.constant 0 : index
    %5 = vector.load %arg4[%c0_4, %c0_5] : memref<1x128xf32, #tpu.memory_space<vmem>>, vector<1x128xf32>
    %6 = vector.broadcast %5 : vector<1x128xf32> to vector<256x128xf32>
    %7 = arith.addf %4, %6 : vector<256x128xf32>
    %cst_6 = arith.constant 0.000000e+00 : f32
    %8 = vector.broadcast %cst_6 : f32 to vector<256x128xf32>
    %9 = arith.maximumf %7, %8 : vector<256x128xf32>
    %10 = vector.shape_cast %9 : vector<256x128xf32> to vector<8x32x128xf32>
    %c0_7 = arith.constant 0 : index
    %c0_8 = arith.constant 0 : index
    %11 = vector.load %arg5[%c0_7, %c0_8] : memref<1x128xf32, #tpu.memory_space<vmem>>, vector<1x128xf32>
    %12 = vector.shape_cast %11 : vector<1x128xf32> to vector<1x1x128xf32>
    %13 = vector.broadcast %12 : vector<1x1x128xf32> to vector<8x32x128xf32>
    %14 = arith.mulf %10, %13 : vector<8x32x128xf32>
    %cst_9 = arith.constant dense<0.000000e+00> : vector<8x32xf32>
    %15 = vector.multi_reduction <add>, %14, %cst_9 [2] : vector<8x32x128xf32> to vector<8x32xf32>
    %c0_10 = arith.constant 0 : index
    %c0_11 = arith.constant 0 : index
    %16 = vector.load %arg6[%c0_10, %c0_11] : memref<1x1xf32, #tpu.memory_space<vmem>>, vector<1x1xf32>
    %17 = vector.broadcast %16 : vector<1x1xf32> to vector<8x32xf32>
    %18 = arith.addf %15, %17 : vector<8x32xf32>
    %c0_12 = arith.constant 0 : index
    %c0_13 = arith.constant 0 : index
    %19 = vector.load %arg2[%c0_12, %c0_13] : memref<8x32xf32, #tpu.memory_space<vmem>>, vector<8x32xf32>
    %20 = arith.addf %18, %19 : vector<8x32xf32>
    %cst_14 = arith.constant dense<0xFF800000> : vector<8xf32>
    %21 = vector.multi_reduction <maximumf>, %20, %cst_14 [1] : vector<8x32xf32> to vector<8xf32>
    %22 = vector.shape_cast %21 : vector<8xf32> to vector<8x1xf32>
    %23 = vector.broadcast %22 : vector<8x1xf32> to vector<8x32xf32>
    %24 = arith.subf %20, %23 : vector<8x32xf32>
    %25 = math.exp %24 : vector<8x32xf32>
    %cst_15 = arith.constant dense<0.000000e+00> : vector<8xf32>
    %26 = vector.multi_reduction <add>, %25, %cst_15 [1] : vector<8x32xf32> to vector<8xf32>
    %27 = vector.shape_cast %26 : vector<8xf32> to vector<8x1xf32>
    %28 = tpu.reciprocal %27 : vector<8x1xf32> -> vector<8x1xf32>
    %29 = vector.broadcast %28 : vector<8x1xf32> to vector<8x32xf32>
    %30 = arith.mulf %25, %29 : vector<8x32xf32>
    %31 = tpu.iota {dimensions = array<i32: 0>} : vector<8x256xi32>
    %32 = tpu.iota {dimensions = array<i32: 1>} : vector<8x256xi32>
    %c32_i32 = arith.constant 32 : i32
    %33 = vector.broadcast %c32_i32 : i32 to vector<8x256xi32>
    %34 = arith.muli %31, %33 : vector<8x256xi32>
    %35 = arith.cmpi sge, %32, %34 : vector<8x256xi32>
    %c32_i32_16 = arith.constant 32 : i32
    %36 = vector.broadcast %c32_i32_16 : i32 to vector<8x256xi32>
    %37 = arith.muli %31, %36 : vector<8x256xi32>
    %c32_i32_17 = arith.constant 32 : i32
    %38 = vector.broadcast %c32_i32_17 : i32 to vector<8x256xi32>
    %39 = arith.addi %37, %38 : vector<8x256xi32>
    %40 = arith.cmpi slt, %32, %39 : vector<8x256xi32>
    %41 = arith.andi %35, %40 : vector<8x256xi1>
    %42 = tpu.concatenate %30, %30, %30, %30, %30, %30, %30, %30 in 1 : vector<8x32xf32>, vector<8x32xf32>, vector<8x32xf32>, vector<8x32xf32>, vector<8x32xf32>, vector<8x32xf32>, vector<8x32xf32>, vector<8x32xf32> -> vector<8x256xf32>
    %cst_18 = arith.constant 0.000000e+00 : f32
    %43 = vector.broadcast %cst_18 : f32 to vector<8x256xf32>
    %44 = arith.select %41, %42, %43 : vector<8x256xi1>, vector<8x256xf32>
    %cst_19 = arith.constant dense<0.000000e+00> : vector<8x128xf32>
    %45 = tpu.matmul %44, %1, %cst_19 {dimension_numbers = #tpu.dot_dimension_numbers<[1], [0], [0], [1], [0, 0, 1, 1], [], []>} : vector<8x256xf32>, vector<256x128xf32>, vector<8x128xf32> -> vector<8x128xf32>
    %46 = arith.truncf %45 : vector<8x128xf32> to vector<8x128xbf16>
    %c0_20 = arith.constant 0 : index
    %c0_21 = arith.constant 0 : index
    %47 = vector.load %arg7[%c0_20, %c0_21] : memref<128x128xbf16, #tpu.memory_space<vmem>>, vector<128x128xbf16>
    %cst_22 = arith.constant dense<0.000000e+00> : vector<8x128xf32>
    %48 = tpu.matmul %46, %47, %cst_22 {dimension_numbers = #tpu.dot_dimension_numbers<[1], [0], [0], [1], [0, 0, 1, 1], [], []>} : vector<8x128xbf16>, vector<128x128xbf16>, vector<8x128xf32> -> vector<8x128xf32>
    %c0_23 = arith.constant 0 : index
    %c0_24 = arith.constant 0 : index
    %49 = vector.load %arg8[%c0_23, %c0_24] : memref<1x128xf32, #tpu.memory_space<vmem>>, vector<1x128xf32>
    %50 = vector.broadcast %49 : vector<1x128xf32> to vector<8x128xf32>
    %51 = arith.addf %48, %50 : vector<8x128xf32>
    %c0_25 = arith.constant 0 : index
    %c0_26 = arith.constant 0 : index
    %52 = vector.load %arg9[%c0_25, %c0_26] : memref<1x128xf32, #tpu.memory_space<vmem>>, vector<1x128xf32>
    %53 = vector.broadcast %52 : vector<1x128xf32> to vector<8x128xf32>
    %54 = arith.mulf %51, %53 : vector<8x128xf32>
    %c0_27 = arith.constant 0 : index
    %c0_28 = arith.constant 0 : index
    %55 = vector.load %arg10[%c0_27, %c0_28] : memref<1x128xf32, #tpu.memory_space<vmem>>, vector<1x128xf32>
    %56 = vector.broadcast %55 : vector<1x128xf32> to vector<8x128xf32>
    %57 = arith.addf %54, %56 : vector<8x128xf32>
    %c0_29 = arith.constant 0 : index
    %c0_30 = arith.constant 0 : index
    %58 = vector.load %arg11[%c0_29, %c0_30] : memref<8x128xf32, #tpu.memory_space<vmem>>, vector<8x128xf32>
    tpu.vector_store %arg11[%c0_29, %c0_30], %57 {strides = array<i32>} : memref<8x128xf32, #tpu.memory_space<vmem>>, vector<8x128xf32>,
    return
  }
  func.func @transform_0(%arg0: i32) -> (i32, i32, i32) {
    %c0_i32 = arith.constant 0 : i32
    %c0_i32_0 = arith.constant 0 : i32
    %c0_i32_1 = arith.constant 0 : i32
    return %arg0, %c0_i32, %c0_i32_0 : i32, i32, i32
  }
  func.func @transform_1(%arg0: i32) -> (i32, i32) {
    %c0_i32 = arith.constant 0 : i32
    %c0_i32_0 = arith.constant 0 : i32
    return %arg0, %c0_i32 : i32, i32
  }
  func.func @transform_2(%arg0: i32) -> (i32, i32) {
    %c0_i32 = arith.constant 0 : i32
    %c0_i32_0 = arith.constant 0 : i32
    %c0_i32_1 = arith.constant 0 : i32
    return %c0_i32, %c0_i32_0 : i32, i32
  }
  func.func @transform_3(%arg0: i32) -> (i32, i32) {
    %c0_i32 = arith.constant 0 : i32
    %c0_i32_0 = arith.constant 0 : i32
    %c0_i32_1 = arith.constant 0 : i32
    return %c0_i32, %c0_i32_0 : i32, i32
  }
  func.func @transform_4(%arg0: i32) -> (i32, i32) {
    %c0_i32 = arith.constant 0 : i32
    %c0_i32_0 = arith.constant 0 : i32
    %c0_i32_1 = arith.constant 0 : i32
    return %c0_i32, %c0_i32_0 : i32, i32
  }
  func.func @transform_5(%arg0: i32) -> (i32, i32) {
    %c0_i32 = arith.constant 0 : i32
    %c0_i32_0 = arith.constant 0 : i32
    %c0_i32_1 = arith.constant 0 : i32
    return %c0_i32, %c0_i32_0 : i32, i32
  }
  func.func @transform_6(%arg0: i32) -> (i32, i32) {
    %c0_i32 = arith.constant 0 : i32
    %c0_i32_0 = arith.constant 0 : i32
    %c0_i32_1 = arith.constant 0 : i32
    return %c0_i32, %c0_i32_0 : i32, i32
  }
  func.func @transform_7(%arg0: i32) -> (i32, i32) {
    %c0_i32 = arith.constant 0 : i32
    %c0_i32_0 = arith.constant 0 : i32
    %c0_i32_1 = arith.constant 0 : i32
    return %c0_i32, %c0_i32_0 : i32, i32
  }
  func.func @transform_8(%arg0: i32) -> (i32, i32) {
    %c0_i32 = arith.constant 0 : i32
    %c0_i32_0 = arith.constant 0 : i32
    %c0_i32_1 = arith.constant 0 : i32
    return %c0_i32, %c0_i32_0 : i32, i32
  }
  func.func @transform_9(%arg0: i32) -> (i32, i32) {
    %c0_i32 = arith.constant 0 : i32
    %c0_i32_0 = arith.constant 0 : i32
    %c0_i32_1 = arith.constant 0 : i32
    return %c0_i32, %c0_i32_0 : i32, i32
  }
  func.func @transform_10(%arg0: i32) -> (i32, i32) {
    %c0_i32 = arith.constant 0 : i32
    %c0_i32_0 = arith.constant 0 : i32
    return %arg0, %c0_i32 : i32, i32
  }
}

</mosaic_0001>

<llo_original>
// kernel: tpu_custom_call.1
$region0: #{tpu_custom_call.1}
  #allocation0 [shape = 'u32[]', space=smem, size = 0x4, offset = 0x4, fixed_abs, tag = 'smem constant byte address 0x4 - core index']
  #allocation1 [shape = 'u32[144,128]{1,0:T(1,128)}', space=vmem, size = 0x12000, scoped, tag = 'internal scratch']
  #allocation2 [shape = 'f32[1,1]{1,0:T(1,128)S(1)}', space=vmem, size = 0x200, scoped, tag = 'scoped memory for tpu_custom_call.1']
  %s0 = inlined_call_operand.hbm [shape: f32[16,32,128], index: 0, kind: input, shape index: {}]
  %s1 = inlined_call_operand.hbm [shape: f32[16,32], index: 1, kind: input, shape index: {}]
  %s2 = inlined_call_operand.hbm [shape: bf16[128,128], index: 2, kind: input, shape index: {}]
  %s3 = inlined_call_operand.vmem [shape: f32[1,128], index: 3, kind: input, shape index: {}]
  %s4 = inlined_call_operand.vmem [shape: f32[1,128], index: 4, kind: input, shape index: {}]
  %s5 = inlined_call_operand.<no memory space> [shape: f32[1,1], index: 5, kind: input, shape index: {}]
  %s6 = inlined_call_operand.hbm [shape: bf16[128,128], index: 6, kind: input, shape index: {}]
  %s7 = inlined_call_operand.vmem [shape: f32[1,128], index: 7, kind: input, shape index: {}]
  %s8 = inlined_call_operand.vmem [shape: f32[1,128], index: 8, kind: input, shape index: {}]
  %s9 = inlined_call_operand.vmem [shape: f32[1,128], index: 9, kind: input, shape index: {}]
  %s10 = inlined_call_operand.hbm [shape: f32[16,128], index: 10, kind: output, shape index: {}]
  %s11 = sld [smem:[#allocation0]]
  $region89: #{tpu_custom_call.1} parent=0
    _
  %s13 = ssub.s32 1, %s11
  %s14 = scalar_select 0, %s13, %s11
  %v15 = vstv %s5
  %16 = vst [vmem:[#allocation2] sm:$0x1] %v15
  $region1: #{tpu_custom_call.1} parent=0
    #allocation3 [shape = 'u8[262144]{0}', space=vmem, size = 0x40000, scoped, tag = 'input window, operand 0']
    #allocation4 [shape = 's32[2]{0}', space=sflag, size = 0x8, scoped, tag = 'scoped memory for tpu_custom_call.1']
    #allocation5 [shape = 's32[2]{0}', space=sflag, size = 0x8, scoped, tag = 'scoped memory for tpu_custom_call.1']
    #allocation6 [shape = 'u8[8192]{0}', space=vmem, size = 0x2000, scoped, tag = 'input window, operand 1']
    #allocation7 [shape = 's32[2]{0}', space=sflag, size = 0x8, scoped, tag = 'scoped memory for tpu_custom_call.1']
    #allocation8 [shape = 'u8[32768]{0}', space=vmem, size = 0x8000, scoped, tag = 'input window, operand 2, single buffered']
    #allocation9 [shape = 'u8[32768]{0}', space=vmem, size = 0x8000, scoped, tag = 'input window, operand 6, single buffered']
    #allocation10 [shape = 's32[1]{0}', space=sflag, size = 0x4, scoped, tag = 'scoped memory for tpu_custom_call.1']
    #allocation11 [shape = 'u8[8192]{0}', space=vmem, size = 0x2000, scoped, tag = 'output window, operand 0']
    %17 = vsyncpa [#allocation4], 0
    %s18 = scalar_lea.sflag [#allocation4], 1
    %19 = vsyncpa %s18, 0
    %20 = vsyncpa [#allocation7], 0
    %s21 = scalar_lea.sflag [#allocation7], 1
    %22 = vsyncpa %s21, 0
    %23 = vsyncpa [#allocation10], 0
    %24 = vsyncpa [#allocation5], 0
    %s25 = scalar_lea.sflag [#allocation5], 1
    %26 = vsyncpa %s25, 0
    loop: start=0, step=1, limit=4
    $region2: #{tpu_custom_call.1} parent=1 // loop_pre_header
      _
    $region3: #{tpu_custom_call.1} parent=1 // loop_header
      %s28 = sphi 0, %s32
      %p29 = scmp.ge.s32.totalorder %s28, 4
      %s38 = sphi 0, %s40
      %s41 = sphi 0, %s38
      %s42 = sphi 0, %s41
      %s58 = sphi 0, %s42
      %s64 = sphi 0, %s66
      %s67 = sphi 0, %s64
      %s68 = sphi 0, %s67
      %s84 = sphi 0, %s68
      %s88 = sphi 0, %s88
      %s90 = sphi 0, %s88
      %s91 = sphi 0, %s90
      %s105 = sphi 0, %s91
      %s109 = sphi 0, %s109
      %s111 = sphi 0, %s109
      %s112 = sphi 0, %s111
      %s126 = sphi 0, %s112
      %s130 = sphi 0, %s130
      %s132 = sphi 0, %s130
      %s133 = sphi 0, %s132
      %s147 = sphi 0, %s133
      %s151 = sphi 0, %s151
      %s153 = sphi 0, %s151
      %s154 = sphi 0, %s153
      %s168 = sphi 0, %s154
      %s172 = sphi 0, %s172
      %s174 = sphi 0, %s172
      %s175 = sphi 0, %s174
      %s189 = sphi 0, %s175
      %s193 = sphi 0, %s193
      %s195 = sphi 0, %s193
      %s196 = sphi 0, %s195
      %s210 = sphi 0, %s196
      %s214 = sphi 0, %s214
      %s216 = sphi 0, %s214
      %s217 = sphi 0, %s216
      %s231 = sphi 0, %s217
      %s235 = sphi 0, %s235
      %s237 = sphi 0, %s235
      %s238 = sphi 0, %s237
      %s252 = sphi 0, %s238
      %s258 = sphi 0, %s260
      %s261 = sphi 0, %s258
      %s262 = sphi 0, %s261
      %s278 = sphi 0, %s262
    $region4: #{tpu_custom_call.1} parent=1 // loop_header_branch
      %31 = sbr.rel (%p29) target = $region8
    $region5: #{tpu_custom_call.1} parent=1 // loop_body
      %s33 = ssub.s32 %s28, 1
      %s34 = ssub.s32 %s28, 2
      %s35 = sadd.s32 %s28, 1
      %s36 = ssub.s32 %s28, %s35
      %p37 = scmp.eq.s32.totalorder %s36, 0
      %s39 = sadd.s32 %s38, 1
      %s40 = scalar_select %p37, %s38, %s39
      %p43 = pneg %p37
      %p44 = scmp.eq.s32.totalorder %s28, 1
      %p45 = por %p43, %p44
      %p46 = scmp.ne.s32.totalorder %s38, %s41
      %p47 = scmp.eq.s32.totalorder %s28, 0
      %p48 = por %p46, %p47
      %p49 = scmp.ne.s32.totalorder %s38, %s41
      %p50 = scmp.eq.s32.totalorder %s33, 1
      %p51 = por %p49, %p50
      %p52 = scmp.ne.s32.totalorder %s41, %s42
      %p53 = scmp.eq.s32.totalorder %s33, 0
      %p54 = por %p52, %p53
      %p55 = scmp.ne.s32.totalorder %s41, %s42
      %p56 = scmp.eq.s32.totalorder %s34, 1
      %p57 = por %p55, %p56
      %p59 = scmp.ne.s32.totalorder %s42, %s58
      %p60 = scmp.eq.s32.totalorder %s34, 0
      %p61 = por %p59, %p60
      %s62 = ssub.s32 %s28, %s35
      %p63 = scmp.eq.s32.totalorder %s62, 0
      %s65 = sadd.s32 %s64, 1
      %s66 = scalar_select %p63, %s64, %s65
      %p69 = pneg %p63
      %p70 = scmp.eq.s32.totalorder %s28, 1
      %p71 = por %p69, %p70
      %p72 = scmp.ne.s32.totalorder %s64, %s67
      %p73 = scmp.eq.s32.totalorder %s28, 0
      %p74 = por %p72, %p73
      %p75 = scmp.ne.s32.totalorder %s64, %s67
      %p76 = scmp.eq.s32.totalorder %s33, 1
      %p77 = por %p75, %p76
      %p78 = scmp.ne.s32.totalorder %s67, %s68
      %p79 = scmp.eq.s32.totalorder %s33, 0
      %p80 = por %p78, %p79
      %p81 = scmp.ne.s32.totalorder %s67, %s68
      %p82 = scmp.eq.s32.totalorder %s34, 1
      %p83 = por %p81, %p82
      %p85 = scmp.ne.s32.totalorder %s68, %s84
      %p86 = scmp.eq.s32.totalorder %s34, 0
      %p87 = por %p85, %p86
      %s89 = sadd.s32 %s88, 1
      %p92 = scmp.eq.s32.totalorder %s28, 1
      %p93 = scmp.ne.s32.totalorder %s88, %s90
      %p94 = scmp.eq.s32.totalorder %s28, 0
      %p95 = por %p93, %p94
      %p96 = scmp.ne.s32.totalorder %s88, %s90
      %p97 = scmp.eq.s32.totalorder %s33, 1
      %p98 = por %p96, %p97
      %p99 = scmp.ne.s32.totalorder %s90, %s91
      %p100 = scmp.eq.s32.totalorder %s33, 0
      %p101 = por %p99, %p100
      %p102 = scmp.ne.s32.totalorder %s90, %s91
      %p103 = scmp.eq.s32.totalorder %s34, 1
      %p104 = por %p102, %p103
      %p106 = scmp.ne.s32.totalorder %s91, %s105
      %p107 = scmp.eq.s32.totalorder %s34, 0
      %p108 = por %p106, %p107
      %s110 = sadd.s32 %s109, 1
      %p113 = scmp.eq.s32.totalorder %s28, 1
      %p114 = scmp.ne.s32.totalorder %s109, %s111
      %p115 = scmp.eq.s32.totalorder %s28, 0
      %p116 = por %p114, %p115
      %p117 = scmp.ne.s32.totalorder %s109, %s111
      %p118 = scmp.eq.s32.totalorder %s33, 1
      %p119 = por %p117, %p118
      %p120 = scmp.ne.s32.totalorder %s111, %s112
      %p121 = scmp.eq.s32.totalorder %s33, 0
      %p122 = por %p120, %p121
      %p123 = scmp.ne.s32.totalorder %s111, %s112
      %p124 = scmp.eq.s32.totalorder %s34, 1
      %p125 = por %p123, %p124
      %p127 = scmp.ne.s32.totalorder %s112, %s126
      %p128 = scmp.eq.s32.totalorder %s34, 0
      %p129 = por %p127, %p128
      %s131 = sadd.s32 %s130, 1
      %p134 = scmp.eq.s32.totalorder %s28, 1
      %p135 = scmp.ne.s32.totalorder %s130, %s132
      %p136 = scmp.eq.s32.totalorder %s28, 0
      %p137 = por %p135, %p136
      %p138 = scmp.ne.s32.totalorder %s130, %s132
      %p139 = scmp.eq.s32.totalorder %s33, 1
      %p140 = por %p138, %p139
      %p141 = scmp.ne.s32.totalorder %s132, %s133
      %p142 = scmp.eq.s32.totalorder %s33, 0
      %p143 = por %p141, %p142
      %p144 = scmp.ne.s32.totalorder %s132, %s133
      %p145 = scmp.eq.s32.totalorder %s34, 1
      %p146 = por %p144, %p145
      %p148 = scmp.ne.s32.totalorder %s133, %s147
      %p149 = scmp.eq.s32.totalorder %s34, 0
      %p150 = por %p148, %p149
      %s152 = sadd.s32 %s151, 1
      %p155 = scmp.eq.s32.totalorder %s28, 1
      %p156 = scmp.ne.s32.totalorder %s151, %s153
      %p157 = scmp.eq.s32.totalorder %s28, 0
      %p158 = por %p156, %p157
      %p159 = scmp.ne.s32.totalorder %s151, %s153
      %p160 = scmp.eq.s32.totalorder %s33, 1
      %p161 = por %p159, %p160
      %p162 = scmp.ne.s32.totalorder %s153, %s154
      %p163 = scmp.eq.s32.totalorder %s33, 0
      %p164 = por %p162, %p163
      %p165 = scmp.ne.s32.totalorder %s153, %s154
      %p166 = scmp.eq.s32.totalorder %s34, 1
      %p167 = por %p165, %p166
      %p169 = scmp.ne.s32.totalorder %s154, %s168
      %p170 = scmp.eq.s32.totalorder %s34, 0
      %p171 = por %p169, %p170
      %s173 = sadd.s32 %s172, 1
      %p176 = scmp.eq.s32.totalorder %s28, 1
      %p177 = scmp.ne.s32.totalorder %s172, %s174
      %p178 = scmp.eq.s32.totalorder %s28, 0
      %p179 = por %p177, %p178
      %p180 = scmp.ne.s32.totalorder %s172, %s174
      %p181 = scmp.eq.s32.totalorder %s33, 1
      %p182 = por %p180, %p181
      %p183 = scmp.ne.s32.totalorder %s174, %s175
      %p184 = scmp.eq.s32.totalorder %s33, 0
      %p185 = por %p183, %p184
      %p186 = scmp.ne.s32.totalorder %s174, %s175
      %p187 = scmp.eq.s32.totalorder %s34, 1
      %p188 = por %p186, %p187
      %p190 = scmp.ne.s32.totalorder %s175, %s189
      %p191 = scmp.eq.s32.totalorder %s34, 0
      %p192 = por %p190, %p191
      %s194 = sadd.s32 %s193, 1
      %p197 = scmp.eq.s32.totalorder %s28, 1
      %p198 = scmp.ne.s32.totalorder %s193, %s195
      %p199 = scmp.eq.s32.totalorder %s28, 0
      %p200 = por %p198, %p199
      %p201 = scmp.ne.s32.totalorder %s193, %s195
      %p202 = scmp.eq.s32.totalorder %s33, 1
      %p203 = por %p201, %p202
      %p204 = scmp.ne.s32.totalorder %s195, %s196
      %p205 = scmp.eq.s32.totalorder %s33, 0
      %p206 = por %p204, %p205
      %p207 = scmp.ne.s32.totalorder %s195, %s196
      %p208 = scmp.eq.s32.totalorder %s34, 1
      %p209 = por %p207, %p208
      %p211 = scmp.ne.s32.totalorder %s196, %s210
      %p212 = scmp.eq.s32.totalorder %s34, 0
      %p213 = por %p211, %p212
      %s215 = sadd.s32 %s214, 1
      %p218 = scmp.eq.s32.totalorder %s28, 1
      %p219 = scmp.ne.s32.totalorder %s214, %s216
      %p220 = scmp.eq.s32.totalorder %s28, 0
      %p221 = por %p219, %p220
      %p222 = scmp.ne.s32.totalorder %s214, %s216
      %p223 = scmp.eq.s32.totalorder %s33, 1
      %p224 = por %p222, %p223
      %p225 = scmp.ne.s32.totalorder %s216, %s217
      %p226 = scmp.eq.s32.totalorder %s33, 0
      %p227 = por %p225, %p226
      %p228 = scmp.ne.s32.totalorder %s216, %s217
      %p229 = scmp.eq.s32.totalorder %s34, 1
      %p230 = por %p228, %p229
      %p232 = scmp.ne.s32.totalorder %s217, %s231
      %p233 = scmp.eq.s32.totalorder %s34, 0
      %p234 = por %p232, %p233
      %s236 = sadd.s32 %s235, 1
      %p239 = scmp.eq.s32.totalorder %s28, 1
      %p240 = scmp.ne.s32.totalorder %s235, %s237
      %p241 = scmp.eq.s32.totalorder %s28, 0
      %p242 = por %p240, %p241
      %p243 = scmp.ne.s32.totalorder %s235, %s237
      %p244 = scmp.eq.s32.totalorder %s33, 1
      %p245 = por %p243, %p244
      %p246 = scmp.ne.s32.totalorder %s237, %s238
      %p247 = scmp.eq.s32.totalorder %s33, 0
      %p248 = por %p246, %p247
      %p249 = scmp.ne.s32.totalorder %s237, %s238
      %p250 = scmp.eq.s32.totalorder %s34, 1
      %p251 = por %p249, %p250
      %p253 = scmp.ne.s32.totalorder %s238, %s252
      %p254 = scmp.eq.s32.totalorder %s34, 0
      %p255 = por %p253, %p254
      %s256 = ssub.s32 %s28, %s35
      %p257 = scmp.eq.s32.totalorder %s256, 0
      %s259 = sadd.s32 %s258, 1
      %s260 = scalar_select %p257, %s258, %s259
      %p263 = pneg %p257
      %p264 = scmp.eq.s32.totalorder %s28, 1
      %p265 = por %p263, %p264
      %p266 = scmp.ne.s32.totalorder %s258, %s261
      %p267 = scmp.eq.s32.totalorder %s28, 0
      %p268 = por %p266, %p267
      %p269 = scmp.ne.s32.totalorder %s258, %s261
      %p270 = scmp.eq.s32.totalorder %s33, 1
      %p271 = por %p269, %p270
      %p272 = scmp.ne.s32.totalorder %s261, %s262
      %p273 = scmp.eq.s32.totalorder %s33, 0
      %p274 = por %p272, %p273
      %p275 = scmp.ne.s32.totalorder %s261, %s262
      %p276 = scmp.eq.s32.totalorder %s34, 1
      %p277 = por %p275, %p276
      %p279 = scmp.ne.s32.totalorder %s262, %s278
      %p280 = scmp.eq.s32.totalorder %s34, 0
      %p281 = por %p279, %p280
      %p282 = scmp.le.s32.totalorder 1, %s28
      %p283 = scmp.lt.s32.totalorder %s28, 3
      %p284 = pnand %p282, %p283
      %p285 = pneg %p284
      // Predicated region
      $region9: #{tpu_custom_call.1} parent=5 // pred_check
        _
      $region10: #{tpu_custom_call.1} parent=5 // pred_check_branch
        %287 = sbr.rel (%p284) target = $region12
      $region11: #{tpu_custom_call.1} parent=5 // pred_region
        %s288 = ssub.s32 %s28, 1
        // Predicated region
        $region13: #{tpu_custom_call.1} parent=11 // pred_check
          %p289 = pneg %p101
        $region14: #{tpu_custom_call.1} parent=11 // pred_check_branch
          %291 = sbr.rel (%p289) target = $region16
        $region15: #{tpu_custom_call.1} parent=11 // pred_region
          %s293 = ssub.s32 1024, 1024
          %294 = vsyncadd [#allocation7], %s293
          %s295 = sshll.u32 [#allocation8], 4
          %s296 = int_to_ptr.vmem [resolvable:$true] %s295
          %301 = dma.hbm_to_vmem [thread:$0]  %s2, 1024, %s296, [#allocation7], 64, 64, 4
        $region16: #{tpu_custom_call.1} parent=11 // pred_fallthru
          _
        // Predicated region
        $region17: #{tpu_custom_call.1} parent=11 // pred_check
          %p302 = pneg %p122
        $region18: #{tpu_custom_call.1} parent=11 // pred_check_branch
          %304 = sbr.rel (%p302) target = $region20
        $region19: #{tpu_custom_call.1} parent=11 // pred_region
          _
        $region20: #{tpu_custom_call.1} parent=11 // pred_fallthru
          _
        // Predicated region
        $region21: #{tpu_custom_call.1} parent=11 // pred_check
          %p305 = pneg %p143
        $region22: #{tpu_custom_call.1} parent=11 // pred_check_branch
          %307 = sbr.rel (%p305) target = $region24
        $region23: #{tpu_custom_call.1} parent=11 // pred_region
          _
        $region24: #{tpu_custom_call.1} parent=11 // pred_fallthru
          _
        // Predicated region
        $region25: #{tpu_custom_call.1} parent=11 // pred_check
          %p308 = pneg %p164
        $region26: #{tpu_custom_call.1} parent=11 // pred_check_branch
          %310 = sbr.rel (%p308) target = $region28
        $region27: #{tpu_custom_call.1} parent=11 // pred_region
          _
        $region28: #{tpu_custom_call.1} parent=11 // pred_fallthru
          _
        // Predicated region
        $region29: #{tpu_custom_call.1} parent=11 // pred_check
          %p311 = pneg %p185
        $region30: #{tpu_custom_call.1} parent=11 // pred_check_branch
          %313 = sbr.rel (%p311) target = $region32
        $region31: #{tpu_custom_call.1} parent=11 // pred_region
          %s315 = ssub.s32 1024, 1024
          %316 = vsyncadd [#allocation10], %s315
          %s317 = sshll.u32 [#allocation9], 4
          %s318 = int_to_ptr.vmem [resolvable:$true] %s317
          %323 = dma.hbm_to_vmem [thread:$0]  %s6, 1024, %s318, [#allocation10], 64, 64, 4
        $region32: #{tpu_custom_call.1} parent=11 // pred_fallthru
          _
        // Predicated region
        $region33: #{tpu_custom_call.1} parent=11 // pred_check
          %p324 = pneg %p206
        $region34: #{tpu_custom_call.1} parent=11 // pred_check_branch
          %326 = sbr.rel (%p324) target = $region36
        $region35: #{tpu_custom_call.1} parent=11 // pred_region
          _
        $region36: #{tpu_custom_call.1} parent=11 // pred_fallthru
          _
        // Predicated region
        $region37: #{tpu_custom_call.1} parent=11 // pred_check
          %p327 = pneg %p227
        $region38: #{tpu_custom_call.1} parent=11 // pred_check_branch
          %329 = sbr.rel (%p327) target = $region40
        $region39: #{tpu_custom_call.1} parent=11 // pred_region
          _
        $region40: #{tpu_custom_call.1} parent=11 // pred_fallthru
          _
        // Predicated region
        $region41: #{tpu_custom_call.1} parent=11 // pred_check
          %p330 = pneg %p248
        $region42: #{tpu_custom_call.1} parent=11 // pred_check_branch
          %332 = sbr.rel (%p330) target = $region44
        $region43: #{tpu_custom_call.1} parent=11 // pred_region
          _
        $region44: #{tpu_custom_call.1} parent=11 // pred_fallthru
          _
      $region12: #{tpu_custom_call.1} parent=5 // pred_fallthru
        _
      %p333 = scmp.lt.s32.totalorder %s28, 2
      // Predicated region
      $region45: #{tpu_custom_call.1} parent=5 // pred_check
        %p334 = pneg %p333
      $region46: #{tpu_custom_call.1} parent=5 // pred_check_branch
        %336 = sbr.rel (%p334) target = $region48
      $region47: #{tpu_custom_call.1} parent=5 // pred_region
        // Predicated region
        $region49: #{tpu_custom_call.1} parent=47 // pred_check
          %p337 = pneg %p48
        $region50: #{tpu_custom_call.1} parent=47 // pred_check_branch
          %339 = sbr.rel (%p337) target = $region52
        $region51: #{tpu_custom_call.1} parent=47 // pred_region
          %s340 = sand.u32 %s38, 1
          %s341 = scalar_lea.sflag [#allocation4], %s340
          %s342 = sand.u32 %s38, 1
          %s343 = smul.addr %s342, 256
          %s344 = scalar_lea.vmem [#allocation3], %s343
          %s345 = smul.u32 8, %s28
          %s347 = ssub.s32 4096, 4096
          %348 = vsyncadd %s341, %s347
          %s349 = smul.addr %s345, 4
          %s350 = smul.addr %s349, 128
          %s351 = scalar_lea.hbm %s0, %s350
          %s352 = sshll.u32 %s344, 4
          %s353 = int_to_ptr.vmem [resolvable:$true] %s352
          %358 = dma.hbm_to_vmem [thread:$0]  %s351, 4096, %s353, %s341, 128, 128, 8
        $region52: #{tpu_custom_call.1} parent=47 // pred_fallthru
          _
        // Predicated region
        $region53: #{tpu_custom_call.1} parent=47 // pred_check
          %p359 = pneg %p74
        $region54: #{tpu_custom_call.1} parent=47 // pred_check_branch
          %361 = sbr.rel (%p359) target = $region56
        $region55: #{tpu_custom_call.1} parent=47 // pred_region
          %s362 = sand.u32 %s28, 1
          %s363 = scalar_lea.sflag [#allocation7], %s362
          %s364 = sand.u32 %s64, 1
          %s365 = smul.addr %s364, 8
          %s366 = scalar_lea.vmem [#allocation6], %s365
          %s368 = ssub.s32 128, 128
          %369 = vsyncadd %s363, %s368
          %s370 = smul.addr %s28, 128
          %s371 = scalar_lea.hbm %s1, %s370
          %s373 = sshll.u32 %s366, 4
          %s374 = int_to_ptr.vmem [resolvable:$true] %s373
          %376 = dma.hbm_to_vmem [thread:$0]  %s371, 128, %s374, %s363
        $region56: #{tpu_custom_call.1} parent=47 // pred_fallthru
          _
      $region48: #{tpu_custom_call.1} parent=5 // pred_fallthru
        _
      %p377 = scmp.le.s32.totalorder 1, %s28
      %p378 = scmp.lt.s32.totalorder %s28, 3
      %p379 = pnand %p377, %p378
      %p380 = pneg %p379
      // Predicated region
      $region57: #{tpu_custom_call.1} parent=5 // pred_check
        _
      $region58: #{tpu_custom_call.1} parent=5 // pred_check_branch
        %382 = sbr.rel (%p379) target = $region60
      $region59: #{tpu_custom_call.1} parent=5 // pred_region
        %s383 = ssub.s32 %s28, 1
        %s384 = sand.u32 %s41, 1
        %s385 = scalar_lea.sflag [#allocation4], %s384
        %s386 = sand.u32 %s41, 1
        %s387 = smul.addr %s386, 256
        %s388 = scalar_lea.vmem [#allocation3], %s387
        // Predicated region
        $region61: #{tpu_custom_call.1} parent=59 // pred_check
          %p389 = pneg %p54
        $region62: #{tpu_custom_call.1} parent=59 // pred_check_branch
          %391 = sbr.rel (%p389) target = $region64
        $region63: #{tpu_custom_call.1} parent=59 // pred_region
          %392 = dma.done %s385, 4096
        $region64: #{tpu_custom_call.1} parent=59 // pred_fallthru
          _
        %s393 = sand.u32 %s33, 1
        %s394 = scalar_lea.sflag [#allocation7], %s393
        %s395 = sand.u32 %s67, 1
        %s396 = smul.addr %s395, 8
        %s397 = scalar_lea.vmem [#allocation6], %s396
        // Predicated region
        $region65: #{tpu_custom_call.1} parent=59 // pred_check
          %p398 = pneg %p80
        $region66: #{tpu_custom_call.1} parent=59 // pred_check_branch
          %400 = sbr.rel (%p398) target = $region68
        $region67: #{tpu_custom_call.1} parent=59 // pred_region
          %401 = dma.done %s394, 128
        $region68: #{tpu_custom_call.1} parent=59 // pred_fallthru
          _
        // Predicated region
        $region69: #{tpu_custom_call.1} parent=59 // pred_check
          %p402 = pneg %p101
        $region70: #{tpu_custom_call.1} parent=59 // pred_check_branch
          %404 = sbr.rel (%p402) target = $region72
        $region71: #{tpu_custom_call.1} parent=59 // pred_region
          %405 = dma.done [#allocation7], 1024
        $region72: #{tpu_custom_call.1} parent=59 // pred_fallthru
          _
        // Predicated region
        $region73: #{tpu_custom_call.1} parent=59 // pred_check
          %p406 = pneg %p185
        $region74: #{tpu_custom_call.1} parent=59 // pred_check_branch
          %408 = sbr.rel (%p406) target = $region76
        $region75: #{tpu_custom_call.1} parent=59 // pred_region
          %409 = dma.done [#allocation10], 1024
        $region76: #{tpu_custom_call.1} parent=59 // pred_fallthru
          _
        %s410 = sand.u32 %s41, 1
        %s411 = scalar_lea.sflag [#allocation4], %s410
        %s412 = sand.u32 %s41, 1
        %s413 = smul.addr %s412, 256
        %s414 = scalar_lea.vmem [#allocation3], %s413
        %p415 = pneg %p54
        %p416 = pneg %p51
        %s417 = sand.u32 %s33, 1
        %s418 = scalar_lea.sflag [#allocation7], %s417
        %s419 = sand.u32 %s67, 1
        %s420 = smul.addr %s419, 8
        %s421 = scalar_lea.vmem [#allocation6], %s420
        %p422 = pneg %p80
        %p423 = pneg %p77
        %p424 = pneg %p101
        %p425 = pneg %p98
        %p426 = pneg %p122
        %p427 = pneg %p119
        %p428 = pneg %p143
        %p429 = pneg %p140
        %p430 = pneg %p164
        %p431 = pneg %p161
        %p432 = pneg %p185
        %p433 = pneg %p182
        %p434 = pneg %p206
        %p435 = pneg %p203
        %p436 = pneg %p227
        %p437 = pneg %p224
        %p438 = pneg %p248
        %p439 = pneg %p245
        %p440 = pneg %p274
        %p441 = pneg %p271
        %s442 = sand.u32 %s261, 1
        %s443 = scalar_lea.sflag [#allocation5], %s442
        %s444 = sand.u32 %s261, 1
        %s445 = smul.addr %s444, 8
        %s446 = scalar_lea.vmem [#allocation11], %s445
        %s447 = smul.u32 8, %s33
        %v449 = vld [vmem:[%s388] sm:$0xff]
        %v450 = vld [vmem:[%s388 + $0x8] sm:$0xff]
        %v451 = vld [vmem:[%s388 + $0x10] sm:$0xff]
        %v452 = vld [vmem:[%s388 + $0x18] sm:$0xff]
        %v453 = vld [vmem:[%s388 + $0x20] sm:$0xff]
        %v454 = vld [vmem:[%s388 + $0x28] sm:$0xff]
        %v455 = vld [vmem:[%s388 + $0x30] sm:$0xff]
        %v456 = vld [vmem:[%s388 + $0x38] sm:$0xff]
        %v457 = vld [vmem:[%s388 + $0x40] sm:$0xff]
        %v458 = vld [vmem:[%s388 + $0x48] sm:$0xff]
        %v459 = vld [vmem:[%s388 + $0x50] sm:$0xff]
        %v460 = vld [vmem:[%s388 + $0x58] sm:$0xff]
        %v461 = vld [vmem:[%s388 + $0x60] sm:$0xff]
        %v462 = vld [vmem:[%s388 + $0x68] sm:$0xff]
        %v463 = vld [vmem:[%s388 + $0x70] sm:$0xff]
        %v464 = vld [vmem:[%s388 + $0x78] sm:$0xff]
        %v465 = vld [vmem:[%s388 + $0x80] sm:$0xff]
        %v466 = vld [vmem:[%s388 + $0x88] sm:$0xff]
        %v467 = vld [vmem:[%s388 + $0x90] sm:$0xff]
        %v468 = vld [vmem:[%s388 + $0x98] sm:$0xff]
        %v469 = vld [vmem:[%s388 + $0xa0] sm:$0xff]
        %v470 = vld [vmem:[%s388 + $0xa8] sm:$0xff]
        %v471 = vld [vmem:[%s388 + $0xb0] sm:$0xff]
        %v472 = vld [vmem:[%s388 + $0xb8] sm:$0xff]
        %v473 = vld [vmem:[%s388 + $0xc0] sm:$0xff]
        %v474 = vld [vmem:[%s388 + $0xc8] sm:$0xff]
        %v475 = vld [vmem:[%s388 + $0xd0] sm:$0xff]
        %v476 = vld [vmem:[%s388 + $0xd8] sm:$0xff]
        %v477 = vld [vmem:[%s388 + $0xe0] sm:$0xff]
        %v478 = vld [vmem:[%s388 + $0xe8] sm:$0xff]
        %v479 = vld [vmem:[%s388 + $0xf0] sm:$0xff]
        %v480 = vld [vmem:[%s388 + $0xf8] sm:$0xff]
        %v481 = vpack.c.bf16 %v450, %v449
        %v482 = vpack.c.bf16 %v452, %v451
        %v483 = vpack.c.bf16 %v454, %v453
        %v484 = vpack.c.bf16 %v456, %v455
        %v485 = vpack.c.bf16 %v458, %v457
        %v486 = vpack.c.bf16 %v460, %v459
        %v487 = vpack.c.bf16 %v462, %v461
        %v488 = vpack.c.bf16 %v464, %v463
        %v489 = vpack.c.bf16 %v466, %v465
        %v490 = vpack.c.bf16 %v468, %v467
        %v491 = vpack.c.bf16 %v470, %v469
        %v492 = vpack.c.bf16 %v472, %v471
        %v493 = vpack.c.bf16 %v474, %v473
        %v494 = vpack.c.bf16 %v476, %v475
        %v495 = vpack.c.bf16 %v478, %v477
        %v496 = vpack.c.bf16 %v480, %v479
        %v497 = vld [vmem:[#allocation8] sm:$0xf]
        %v498 = vld [vmem:[#allocation8 + $0x4] sm:$0xf]
        %v499 = vld [vmem:[#allocation8 + $0x8] sm:$0xf]
        %v500 = vld [vmem:[#allocation8 + $0xc] sm:$0xf]
        %v501 = vld [vmem:[#allocation8 + $0x10] sm:$0xf]
        %v502 = vld [vmem:[#allocation8 + $0x14] sm:$0xf]
        %v503 = vld [vmem:[#allocation8 + $0x18] sm:$0xf]
        %v504 = vld [vmem:[#allocation8 + $0x1c] sm:$0xf]
        %v505 = vld [vmem:[#allocation8 + $0x20] sm:$0xf]
        %v506 = vld [vmem:[#allocation8 + $0x24] sm:$0xf]
        %v507 = vld [vmem:[#allocation8 + $0x28] sm:$0xf]
        %v508 = vld [vmem:[#allocation8 + $0x2c] sm:$0xf]
        %v509 = vld [vmem:[#allocation8 + $0x30] sm:$0xf]
        %v510 = vld [vmem:[#allocation8 + $0x34] sm:$0xf]
        %v511 = vld [vmem:[#allocation8 + $0x38] sm:$0xf]
        %v512 = vld [vmem:[#allocation8 + $0x3c] sm:$0xf]
        %v513 = vld [vmem:[%s3] sm:$0x1]
        %v515 = vlaneseq
        %v516 = vshrl.u32 %v515, 7
        %v517 = vsub.s32 0, %v516
        %v518 = vrot.slane %v513, %v517
        %v536 = vunpack.c.l.b16 %v497
        %v537 = vunpack.c.l.b16 %v498
        %v538 = vunpack.c.l.b16 %v499
        %v539 = vunpack.c.l.b16 %v500
        %v540 = vunpack.c.l.b16 %v501
        %v541 = vunpack.c.l.b16 %v502
        %v542 = vunpack.c.l.b16 %v503
        %v543 = vunpack.c.l.b16 %v504
        %v544 = vunpack.c.l.b16 %v505
        %v545 = vunpack.c.l.b16 %v506
        %v546 = vunpack.c.l.b16 %v507
        %v547 = vunpack.c.l.b16 %v508
        %v548 = vunpack.c.l.b16 %v509
        %v549 = vunpack.c.l.b16 %v510
        %v550 = vunpack.c.l.b16 %v511
        %v551 = vunpack.c.l.b16 %v512
        %v552 = vpack.c.b16 %v537, %v536
        %v553 = vpack.c.b16 %v539, %v538
        %v554 = vpack.c.b16 %v541, %v540
        %v555 = vpack.c.b16 %v543, %v542
        %v556 = vpack.c.b16 %v545, %v544
        %v557 = vpack.c.b16 %v547, %v546
        %v558 = vpack.c.b16 %v549, %v548
        %v559 = vpack.c.b16 %v551, %v550
        %568 = vmatprep.subr.bf16.mxu0 0
        %569 = vmatpush1.bf16.msra.mxu0 %v559
        %570 = vmatprep.subr.bf16.mxu0 0
        %571 = vmatpush1.bf16.msra.mxu0 %v558
        %572 = vmatprep.subr.bf16.mxu0 0
        %573 = vmatpush1.bf16.msra.mxu0 %v557
        %574 = vmatprep.subr.bf16.mxu0 0
        %575 = vmatpush1.bf16.msra.mxu0 %v556
        %576 = vmatprep.subr.bf16.mxu0 0
        %577 = vmatpush1.bf16.msra.mxu0 %v555
        %578 = vmatprep.subr.bf16.mxu0 0
        %579 = vmatpush1.bf16.msra.mxu0 %v554
        %580 = vmatprep.subr.bf16.mxu0 0
        %581 = vmatpush1.bf16.msra.mxu0 %v553
        %582 = vmatprep.subr.bf16.mxu0 0
        %583 = vmatpush1.bf16.msra.mxu0 %v552
        %584 = vmatprep.subr.bf16.mxu0 0
        %585 = vmatpush2.bf16.msra.mxu0 0
        %586 = vmatprep.subr.bf16.mxu0 0
        %587 = vmatpush2.bf16.msra.mxu0 0
        %588 = vmatprep.subr.bf16.mxu0 0
        %589 = vmatpush2.bf16.msra.mxu0 0
        %590 = vmatprep.subr.bf16.mxu0 0
        %591 = vmatpush2.bf16.msra.mxu0 0
        %592 = vmatprep.subr.bf16.mxu0 0
        %593 = vmatpush2.bf16.msra.mxu0 0
        %594 = vmatprep.subr.bf16.mxu0 0
        %595 = vmatpush2.bf16.msra.mxu0 0
        %596 = vmatprep.subr.bf16.mxu0 0
        %597 = vmatpush2.bf16.msra.mxu0 0
        %598 = vmatprep.subr.bf16.mxu0 0
        %599 = vmatpush2.bf16.msra.mxu0 0
        %600 = vmatprep.mubr.bf16.mxu0 0
        %601 = vmatmul.mubr.bf16.gmra.mxu0 %v481
        %v602 = vpop.f32.mrf.mxu0
        %v603 = vadd.f32 %v518, %v602
        %v604 = vpop.f32.mrf.mxu0
        %v605 = vpop.f32.mrf.mxu0
        %v606 = vadd.f32 %v518, %v605
        %v607 = vpop.f32.mrf.mxu0
        %608 = vmatprep.mubr.bf16.mxu0 0
        %609 = vmatmul.mubr.bf16.gmra.mxu0 %v482
        %v610 = vpop.f32.mrf.mxu0
        %v611 = vadd.f32 %v518, %v610
        %v612 = vpop.f32.mrf.mxu0
        %v613 = vpop.f32.mrf.mxu0
        %v614 = vadd.f32 %v518, %v613
        %v615 = vpop.f32.mrf.mxu0
        %616 = vmatprep.mubr.bf16.mxu0 0
        %617 = vmatmul.mubr.bf16.gmra.mxu0 %v483
        %v618 = vpop.f32.mrf.mxu0
        %v619 = vadd.f32 %v518, %v618
        %v620 = vpop.f32.mrf.mxu0
        %v621 = vpop.f32.mrf.mxu0
        %v622 = vadd.f32 %v518, %v621
        %v623 = vpop.f32.mrf.mxu0
        %624 = vmatprep.mubr.bf16.mxu0 0
        %625 = vmatmul.mubr.bf16.gmra.mxu0 %v484
        %v626 = vpop.f32.mrf.mxu0
        %v627 = vadd.f32 %v518, %v626
        %v628 = vpop.f32.mrf.mxu0
        %v629 = vpop.f32.mrf.mxu0
        %v630 = vadd.f32 %v518, %v629
        %v631 = vpop.f32.mrf.mxu0
        %632 = vmatprep.mubr.bf16.mxu0 0
        %633 = vmatmul.mubr.bf16.gmra.mxu0 %v485
        %v634 = vpop.f32.mrf.mxu0
        %v635 = vadd.f32 %v518, %v634
        %v636 = vpop.f32.mrf.mxu0
        %v637 = vpop.f32.mrf.mxu0
        %v638 = vadd.f32 %v518, %v637
        %v639 = vpop.f32.mrf.mxu0
        %640 = vmatprep.mubr.bf16.mxu0 0
        %641 = vmatmul.mubr.bf16.gmra.mxu0 %v486
        %v642 = vpop.f32.mrf.mxu0
        %v643 = vadd.f32 %v518, %v642
        %v644 = vpop.f32.mrf.mxu0
        %v645 = vpop.f32.mrf.mxu0
        %v646 = vadd.f32 %v518, %v645
        %v647 = vpop.f32.mrf.mxu0
        %648 = vmatprep.mubr.bf16.mxu0 0
        %649 = vmatmul.mubr.bf16.gmra.mxu0 %v487
        %v650 = vpop.f32.mrf.mxu0
        %v651 = vadd.f32 %v518, %v650
        %v652 = vpop.f32.mrf.mxu0
        %v653 = vpop.f32.mrf.mxu0
        %v654 = vadd.f32 %v518, %v653
        %v655 = vpop.f32.mrf.mxu0
        %656 = vmatprep.mubr.bf16.mxu0 0
        %657 = vmatmul.mubr.bf16.gmra.mxu0 %v488
        %v658 = vpop.f32.mrf.mxu0
        %v659 = vadd.f32 %v518, %v658
        %v660 = vpop.f32.mrf.mxu0
        %v661 = vpop.f32.mrf.mxu0
        %v662 = vadd.f32 %v518, %v661
        %v663 = vpop.f32.mrf.mxu0
        %664 = vmatprep.mubr.bf16.mxu0 0
        %665 = vmatmul.mubr.bf16.gmra.mxu0 %v489
        %v666 = vpop.f32.mrf.mxu0
        %v667 = vadd.f32 %v518, %v666
        %v668 = vpop.f32.mrf.mxu0
        %v669 = vpop.f32.mrf.mxu0
        %v670 = vadd.f32 %v518, %v669
        %v671 = vpop.f32.mrf.mxu0
        %672 = vmatprep.mubr.bf16.mxu0 0
        %673 = vmatmul.mubr.bf16.gmra.mxu0 %v490
        %v674 = vpop.f32.mrf.mxu0
        %v675 = vadd.f32 %v518, %v674
        %v676 = vpop.f32.mrf.mxu0
        %v677 = vpop.f32.mrf.mxu0
        %v678 = vadd.f32 %v518, %v677
        %v679 = vpop.f32.mrf.mxu0
        %680 = vmatprep.mubr.bf16.mxu0 0
        %681 = vmatmul.mubr.bf16.gmra.mxu0 %v491
        %v682 = vpop.f32.mrf.mxu0
        %v683 = vadd.f32 %v518, %v682
        %v684 = vpop.f32.mrf.mxu0
        %v685 = vpop.f32.mrf.mxu0
        %v686 = vadd.f32 %v518, %v685
        %v687 = vpop.f32.mrf.mxu0
        %688 = vmatprep.mubr.bf16.mxu0 0
        %689 = vmatmul.mubr.bf16.gmra.mxu0 %v492
        %v690 = vpop.f32.mrf.mxu0
        %v691 = vadd.f32 %v518, %v690
        %v692 = vpop.f32.mrf.mxu0
        %v693 = vpop.f32.mrf.mxu0
        %v694 = vadd.f32 %v518, %v693
        %v695 = vpop.f32.mrf.mxu0
        %696 = vmatprep.mubr.bf16.mxu0 0
        %697 = vmatmul.mubr.bf16.gmra.mxu0 %v493
        %v698 = vpop.f32.mrf.mxu0
        %v699 = vadd.f32 %v518, %v698
        %v700 = vpop.f32.mrf.mxu0
        %v701 = vpop.f32.mrf.mxu0
        %v702 = vadd.f32 %v518, %v701
        %v703 = vpop.f32.mrf.mxu0
        %704 = vmatprep.mubr.bf16.mxu0 0
        %705 = vmatmul.mubr.bf16.gmra.mxu0 %v494
        %v706 = vpop.f32.mrf.mxu0
        %v707 = vadd.f32 %v518, %v706
        %v708 = vpop.f32.mrf.mxu0
        %v709 = vpop.f32.mrf.mxu0
        %v710 = vadd.f32 %v518, %v709
        %v711 = vpop.f32.mrf.mxu0
        %712 = vmatprep.mubr.bf16.mxu0 0
        %713 = vmatmul.mubr.bf16.gmra.mxu0 %v495
        %v714 = vpop.f32.mrf.mxu0
        %v715 = vadd.f32 %v518, %v714
        %v716 = vpop.f32.mrf.mxu0
        %v717 = vpop.f32.mrf.mxu0
        %v718 = vadd.f32 %v518, %v717
        %v719 = vpop.f32.mrf.mxu0
        %720 = vmatprep.mubr.bf16.mxu0 0
        %721 = vmatmul.mubr.bf16.gmra.mxu0 %v496
        %v722 = vpop.f32.mrf.mxu0
        %v723 = vadd.f32 %v518, %v722
        %v724 = vpop.f32.mrf.mxu0
        %v725 = vpop.f32.mrf.mxu0
        %v726 = vadd.f32 %v518, %v725
        %v727 = vpop.f32.mrf.mxu0
        %728 = vdwg.mxu0
        %v729 = vmax.f32 %v603, 0.0
        %v730 = vmax.f32 %v606, 0.0
        %v731 = vmax.f32 %v611, 0.0
        %v732 = vmax.f32 %v614, 0.0
        %v733 = vmax.f32 %v619, 0.0
        %v734 = vmax.f32 %v622, 0.0
        %v735 = vmax.f32 %v627, 0.0
        %v736 = vmax.f32 %v630, 0.0
        %v737 = vmax.f32 %v635, 0.0
        %v738 = vmax.f32 %v638, 0.0
        %v739 = vmax.f32 %v643, 0.0
        %v740 = vmax.f32 %v646, 0.0
        %v741 = vmax.f32 %v651, 0.0
        %v742 = vmax.f32 %v654, 0.0
        %v743 = vmax.f32 %v659, 0.0
        %v744 = vmax.f32 %v662, 0.0
        %v745 = vmax.f32 %v667, 0.0
        %v746 = vmax.f32 %v670, 0.0
        %v747 = vmax.f32 %v675, 0.0
        %v748 = vmax.f32 %v678, 0.0
        %v749 = vmax.f32 %v683, 0.0
        %v750 = vmax.f32 %v686, 0.0
        %v751 = vmax.f32 %v691, 0.0
        %v752 = vmax.f32 %v694, 0.0
        %v753 = vmax.f32 %v699, 0.0
        %v754 = vmax.f32 %v702, 0.0
        %v755 = vmax.f32 %v707, 0.0
        %v756 = vmax.f32 %v710, 0.0
        %v757 = vmax.f32 %v715, 0.0
        %v758 = vmax.f32 %v718, 0.0
        %v759 = vmax.f32 %v723, 0.0
        %v760 = vmax.f32 %v726, 0.0
        %v761 = vld [vmem:[%s4] sm:$0x1]
        %v763 = vlaneseq
        %v764 = vshrl.u32 %v763, 7
        %v765 = vsub.s32 0, %v764
        %v766 = vrot.slane %v761, %v765
        %v768 = vmul.f32 %v729, %v766
        %v769 = vmul.f32 %v730, %v766
        %v770 = vmul.f32 %v731, %v766
        %v771 = vmul.f32 %v732, %v766
        %v772 = vmul.f32 %v733, %v766
        %v773 = vmul.f32 %v734, %v766
        %v774 = vmul.f32 %v735, %v766
        %v775 = vmul.f32 %v736, %v766
        %v776 = vmul.f32 %v737, %v766
        %v777 = vmul.f32 %v738, %v766
        %v778 = vmul.f32 %v739, %v766
        %v779 = vmul.f32 %v740, %v766
        %v780 = vmul.f32 %v741, %v766
        %v781 = vmul.f32 %v742, %v766
        %v782 = vmul.f32 %v743, %v766
        %v783 = vmul.f32 %v744, %v766
        %v784 = vmul.f32 %v745, %v766
        %v785 = vmul.f32 %v746, %v766
        %v786 = vmul.f32 %v747, %v766
        %v787 = vmul.f32 %v748, %v766
        %v788 = vmul.f32 %v749, %v766
        %v789 = vmul.f32 %v750, %v766
        %v790 = vmul.f32 %v751, %v766
        %v791 = vmul.f32 %v752, %v766
        %v792 = vmul.f32 %v753, %v766
        %v793 = vmul.f32 %v754, %v766
        %v794 = vmul.f32 %v755, %v766
        %v795 = vmul.f32 %v756, %v766
        %v796 = vmul.f32 %v757, %v766
        %v797 = vmul.f32 %v758, %v766
        %v798 = vmul.f32 %v759, %v766
        %v799 = vmul.f32 %v760, %v766
        %800 = vadd.xlane.f32.xlu0 %v768
        %v801 = vpop.xlane.xlu0 %800
        %802 = vadd.xlane.f32.xlu0 %v769
        %v803 = vpop.xlane.xlu0 %802
        %804 = vadd.xlane.f32.xlu0 %v770
        %v805 = vpop.xlane.xlu0 %804
        %806 = vadd.xlane.f32.xlu0 %v771
        %v807 = vpop.xlane.xlu0 %806
        %808 = vadd.xlane.f32.xlu0 %v772
        %v809 = vpop.xlane.xlu0 %808
        %810 = vadd.xlane.f32.xlu0 %v773
        %v811 = vpop.xlane.xlu0 %810
        %812 = vadd.xlane.f32.xlu0 %v774
        %v813 = vpop.xlane.xlu0 %812
        %814 = vadd.xlane.f32.xlu0 %v775
        %v815 = vpop.xlane.xlu0 %814
        %816 = vadd.xlane.f32.xlu0 %v776
        %v817 = vpop.xlane.xlu0 %816
        %818 = vadd.xlane.f32.xlu0 %v777
        %v819 = vpop.xlane.xlu0 %818
        %820 = vadd.xlane.f32.xlu0 %v778
        %v821 = vpop.xlane.xlu0 %820
        %822 = vadd.xlane.f32.xlu0 %v779
        %v823 = vpop.xlane.xlu0 %822
        %824 = vadd.xlane.f32.xlu0 %v780
        %v825 = vpop.xlane.xlu0 %824
        %826 = vadd.xlane.f32.xlu0 %v781
        %v827 = vpop.xlane.xlu0 %826
        %828 = vadd.xlane.f32.xlu0 %v782
        %v829 = vpop.xlane.xlu0 %828
        %830 = vadd.xlane.f32.xlu0 %v783
        %v831 = vpop.xlane.xlu0 %830
        %832 = vadd.xlane.f32.xlu0 %v784
        %v833 = vpop.xlane.xlu0 %832
        %834 = vadd.xlane.f32.xlu0 %v785
        %v835 = vpop.xlane.xlu0 %834
        %836 = vadd.xlane.f32.xlu0 %v786
        %v837 = vpop.xlane.xlu0 %836
        %838 = vadd.xlane.f32.xlu0 %v787
        %v839 = vpop.xlane.xlu0 %838
        %840 = vadd.xlane.f32.xlu0 %v788
        %v841 = vpop.xlane.xlu0 %840
        %842 = vadd.xlane.f32.xlu0 %v789
        %v843 = vpop.xlane.xlu0 %842
        %844 = vadd.xlane.f32.xlu0 %v790
        %v845 = vpop.xlane.xlu0 %844
        %846 = vadd.xlane.f32.xlu0 %v791
        %v847 = vpop.xlane.xlu0 %846
        %848 = vadd.xlane.f32.xlu0 %v792
        %v849 = vpop.xlane.xlu0 %848
        %850 = vadd.xlane.f32.xlu0 %v793
        %v851 = vpop.xlane.xlu0 %850
        %852 = vadd.xlane.f32.xlu0 %v794
        %v853 = vpop.xlane.xlu0 %852
        %854 = vadd.xlane.f32.xlu0 %v795
        %v855 = vpop.xlane.xlu0 %854
        %856 = vadd.xlane.f32.xlu0 %v796
        %v857 = vpop.xlane.xlu0 %856
        %858 = vadd.xlane.f32.xlu0 %v797
        %v859 = vpop.xlane.xlu0 %858
        %860 = vadd.xlane.f32.xlu0 %v798
        %v861 = vpop.xlane.xlu0 %860
        %862 = vadd.xlane.f32.xlu0 %v799
        %v863 = vpop.xlane.xlu0 %862
        %v864 = vld [vmem:[#allocation2] sm:$0x1]
        %v866 = vlaneseq
        %v867 = vshrl.u32 %v866, 7
        %v868 = vsub.s32 0, %v867
        %v869 = vrot.slane %v864, %v868
        %870 = vset.pattern.permute.xlu0 0
        %871 = vperm.xlu0 %870, %v869
        %v872 = vpop.permute.xlu0 %871
        %v874 = vadd.f32 %v801, %v872
        %v875 = vadd.f32 %v803, %v872
        %v876 = vadd.f32 %v805, %v872
        %v877 = vadd.f32 %v807, %v872
        %v878 = vadd.f32 %v809, %v872
        %v879 = vadd.f32 %v811, %v872
        %v880 = vadd.f32 %v813, %v872
        %v881 = vadd.f32 %v815, %v872
        %v882 = vadd.f32 %v817, %v872
        %v883 = vadd.f32 %v819, %v872
        %v884 = vadd.f32 %v821, %v872
        %v885 = vadd.f32 %v823, %v872
        %v886 = vadd.f32 %v825, %v872
        %v887 = vadd.f32 %v827, %v872
        %v888 = vadd.f32 %v829, %v872
        %v889 = vadd.f32 %v831, %v872
        %v890 = vadd.f32 %v833, %v872
        %v891 = vadd.f32 %v835, %v872
        %v892 = vadd.f32 %v837, %v872
        %v893 = vadd.f32 %v839, %v872
        %v894 = vadd.f32 %v841, %v872
        %v895 = vadd.f32 %v843, %v872
        %v896 = vadd.f32 %v845, %v872
        %v897 = vadd.f32 %v847, %v872
        %v898 = vadd.f32 %v849, %v872
        %v899 = vadd.f32 %v851, %v872
        %v900 = vadd.f32 %v853, %v872
        %v901 = vadd.f32 %v855, %v872
        %v902 = vadd.f32 %v857, %v872
        %v903 = vadd.f32 %v859, %v872
        %v904 = vadd.f32 %v861, %v872
        %v905 = vadd.f32 %v863, %v872
        %v906 = vld [vmem:[%s397] sm:$0xff]
        %v908 = vlaneseq
        %v909 = vshrl.u32 %v908, 7
        %v910 = vsub.s32 0, %v909
        %v911 = vrot.slane %v906, %v910
        %913 = vbcast.lane.b32.xlu0 %v911, 256
        %v914 = vpop.permute.xlu0 %913
        %s916 = sor.u32 256, 8
        %917 = vbcast.lane.b32.xlu0 %v911, %s916
        %v918 = vpop.permute.xlu0 %917
        %s920 = sor.u32 256, 16
        %921 = vbcast.lane.b32.xlu0 %v911, %s920
        %v922 = vpop.permute.xlu0 %921
        %s924 = sor.u32 256, 24
        %925 = vbcast.lane.b32.xlu0 %v911, %s924
        %v926 = vpop.permute.xlu0 %925
        %v927 = vlaneseq
        %v928 = vshrl.u32 %v927, 7
        %v929 = vsub.s32 1, %v928
        %v930 = vrot.slane %v906, %v929
        %932 = vbcast.lane.b32.xlu0 %v930, 256
        %v933 = vpop.permute.xlu0 %932
        %s935 = sor.u32 256, 8
        %936 = vbcast.lane.b32.xlu0 %v930, %s935
        %v937 = vpop.permute.xlu0 %936
        %s939 = sor.u32 256, 16
        %940 = vbcast.lane.b32.xlu0 %v930, %s939
        %v941 = vpop.permute.xlu0 %940
        %s943 = sor.u32 256, 24
        %944 = vbcast.lane.b32.xlu0 %v930, %s943
        %v945 = vpop.permute.xlu0 %944
        %v946 = vlaneseq
        %v947 = vshrl.u32 %v946, 7
        %v948 = vsub.s32 2, %v947
        %v949 = vrot.slane %v906, %v948
        %951 = vbcast.lane.b32.xlu0 %v949, 256
        %v952 = vpop.permute.xlu0 %951
        %s954 = sor.u32 256, 8
        %955 = vbcast.lane.b32.xlu0 %v949, %s954
        %v956 = vpop.permute.xlu0 %955
        %s958 = sor.u32 256, 16
        %959 = vbcast.lane.b32.xlu0 %v949, %s958
        %v960 = vpop.permute.xlu0 %959
        %s962 = sor.u32 256, 24
        %963 = vbcast.lane.b32.xlu0 %v949, %s962
        %v964 = vpop.permute.xlu0 %963
        %v965 = vlaneseq
        %v966 = vshrl.u32 %v965, 7
        %v967 = vsub.s32 3, %v966
        %v968 = vrot.slane %v906, %v967
        %970 = vbcast.lane.b32.xlu0 %v968, 256
        %v971 = vpop.permute.xlu0 %970
        %s973 = sor.u32 256, 8
        %974 = vbcast.lane.b32.xlu0 %v968, %s973
        %v975 = vpop.permute.xlu0 %974
        %s977 = sor.u32 256, 16
        %978 = vbcast.lane.b32.xlu0 %v968, %s977
        %v979 = vpop.permute.xlu0 %978
        %s981 = sor.u32 256, 24
        %982 = vbcast.lane.b32.xlu0 %v968, %s981
        %v983 = vpop.permute.xlu0 %982
        %v984 = vlaneseq
        %v985 = vshrl.u32 %v984, 7
        %v986 = vsub.s32 4, %v985
        %v987 = vrot.slane %v906, %v986
        %989 = vbcast.lane.b32.xlu0 %v987, 256
        %v990 = vpop.permute.xlu0 %989
        %s992 = sor.u32 256, 8
        %993 = vbcast.lane.b32.xlu0 %v987, %s992
        %v994 = vpop.permute.xlu0 %993
        %s996 = sor.u32 256, 16
        %997 = vbcast.lane.b32.xlu0 %v987, %s996
        %v998 = vpop.permute.xlu0 %997
        %s1000 = sor.u32 256, 24
        %1001 = vbcast.lane.b32.xlu0 %v987, %s1000
        %v1002 = vpop.permute.xlu0 %1001
        %v1003 = vlaneseq
        %v1004 = vshrl.u32 %v1003, 7
        %v1005 = vsub.s32 5, %v1004
        %v1006 = vrot.slane %v906, %v1005
        %1008 = vbcast.lane.b32.xlu0 %v1006, 256
        %v1009 = vpop.permute.xlu0 %1008
        %s1011 = sor.u32 256, 8
        %1012 = vbcast.lane.b32.xlu0 %v1006, %s1011
        %v1013 = vpop.permute.xlu0 %1012
        %s1015 = sor.u32 256, 16
        %1016 = vbcast.lane.b32.xlu0 %v1006, %s1015
        %v1017 = vpop.permute.xlu0 %1016
        %s1019 = sor.u32 256, 24
        %1020 = vbcast.lane.b32.xlu0 %v1006, %s1019
        %v1021 = vpop.permute.xlu0 %1020
        %v1022 = vlaneseq
        %v1023 = vshrl.u32 %v1022, 7
        %v1024 = vsub.s32 6, %v1023
        %v1025 = vrot.slane %v906, %v1024
        %1027 = vbcast.lane.b32.xlu0 %v1025, 256
        %v1028 = vpop.permute.xlu0 %1027
        %s1030 = sor.u32 256, 8
        %1031 = vbcast.lane.b32.xlu0 %v1025, %s1030
        %v1032 = vpop.permute.xlu0 %1031
        %s1034 = sor.u32 256, 16
        %1035 = vbcast.lane.b32.xlu0 %v1025, %s1034
        %v1036 = vpop.permute.xlu0 %1035
        %s1038 = sor.u32 256, 24
        %1039 = vbcast.lane.b32.xlu0 %v1025, %s1038
        %v1040 = vpop.permute.xlu0 %1039
        %v1041 = vlaneseq
        %v1042 = vshrl.u32 %v1041, 7
        %v1043 = vsub.s32 7, %v1042
        %v1044 = vrot.slane %v906, %v1043
        %1046 = vbcast.lane.b32.xlu0 %v1044, 256
        %v1047 = vpop.permute.xlu0 %1046
        %s1049 = sor.u32 256, 8
        %1050 = vbcast.lane.b32.xlu0 %v1044, %s1049
        %v1051 = vpop.permute.xlu0 %1050
        %s1053 = sor.u32 256, 16
        %1054 = vbcast.lane.b32.xlu0 %v1044, %s1053
        %v1055 = vpop.permute.xlu0 %1054
        %s1057 = sor.u32 256, 24
        %1058 = vbcast.lane.b32.xlu0 %v1044, %s1057
        %v1059 = vpop.permute.xlu0 %1058
        %v1092 = vadd.f32 %v874, %v914
        %v1093 = vadd.f32 %v875, %v918
        %v1094 = vadd.f32 %v876, %v922
        %v1095 = vadd.f32 %v877, %v926
        %v1096 = vadd.f32 %v878, %v933
        %v1097 = vadd.f32 %v879, %v937
        %v1098 = vadd.f32 %v880, %v941
        %v1099 = vadd.f32 %v881, %v945
        %v1100 = vadd.f32 %v882, %v952
        %v1101 = vadd.f32 %v883, %v956
        %v1102 = vadd.f32 %v884, %v960
        %v1103 = vadd.f32 %v885, %v964
        %v1104 = vadd.f32 %v886, %v971
        %v1105 = vadd.f32 %v887, %v975
        %v1106 = vadd.f32 %v888, %v979
        %v1107 = vadd.f32 %v889, %v983
        %v1108 = vadd.f32 %v890, %v990
        %v1109 = vadd.f32 %v891, %v994
        %v1110 = vadd.f32 %v892, %v998
        %v1111 = vadd.f32 %v893, %v1002
        %v1112 = vadd.f32 %v894, %v1009
        %v1113 = vadd.f32 %v895, %v1013
        %v1114 = vadd.f32 %v896, %v1017
        %v1115 = vadd.f32 %v897, %v1021
        %v1116 = vadd.f32 %v898, %v1028
        %v1117 = vadd.f32 %v899, %v1032
        %v1118 = vadd.f32 %v900, %v1036
        %v1119 = vadd.f32 %v901, %v1040
        %v1120 = vadd.f32 %v902, %v1047
        %v1121 = vadd.f32 %v903, %v1051
        %v1122 = vadd.f32 %v904, %v1055
        %v1123 = vadd.f32 %v905, %v1059
        %1156 = vset.pattern.permute.xlu0 0
        %1157 = vperm.xlu0 %1156, %v1092
        %v1158 = vpop.permute.xlu0 %1157
        %1159 = vset.pattern.permute.xlu0 0
        %1160 = vperm.xlu0 %1159, %v1093
        %v1161 = vpop.permute.xlu0 %1160
        %1162 = vset.pattern.permute.xlu0 0
        %1163 = vperm.xlu0 %1162, %v1094
        %v1164 = vpop.permute.xlu0 %1163
        %1165 = vset.pattern.permute.xlu0 0
        %1166 = vperm.xlu0 %1165, %v1095
        %v1167 = vpop.permute.xlu0 %1166
        %1168 = vset.pattern.permute.xlu0 0
        %1169 = vperm.xlu0 %1168, %v1096
        %v1170 = vpop.permute.xlu0 %1169
        %1171 = vset.pattern.permute.xlu0 0
        %1172 = vperm.xlu0 %1171, %v1097
        %v1173 = vpop.permute.xlu0 %1172
        %1174 = vset.pattern.permute.xlu0 0
        %1175 = vperm.xlu0 %1174, %v1098
        %v1176 = vpop.permute.xlu0 %1175
        %1177 = vset.pattern.permute.xlu0 0
        %1178 = vperm.xlu0 %1177, %v1099
        %v1179 = vpop.permute.xlu0 %1178
        %1180 = vset.pattern.permute.xlu0 0
        %1181 = vperm.xlu0 %1180, %v1100
        %v1182 = vpop.permute.xlu0 %1181
        %1183 = vset.pattern.permute.xlu0 0
        %1184 = vperm.xlu0 %1183, %v1101
        %v1185 = vpop.permute.xlu0 %1184
        %1186 = vset.pattern.permute.xlu0 0
        %1187 = vperm.xlu0 %1186, %v1102
        %v1188 = vpop.permute.xlu0 %1187
        %1189 = vset.pattern.permute.xlu0 0
        %1190 = vperm.xlu0 %1189, %v1103
        %v1191 = vpop.permute.xlu0 %1190
        %1192 = vset.pattern.permute.xlu0 0
        %1193 = vperm.xlu0 %1192, %v1104
        %v1194 = vpop.permute.xlu0 %1193
        %1195 = vset.pattern.permute.xlu0 0
        %1196 = vperm.xlu0 %1195, %v1105
        %v1197 = vpop.permute.xlu0 %1196
        %1198 = vset.pattern.permute.xlu0 0
        %1199 = vperm.xlu0 %1198, %v1106
        %v1200 = vpop.permute.xlu0 %1199
        %1201 = vset.pattern.permute.xlu0 0
        %1202 = vperm.xlu0 %1201, %v1107
        %v1203 = vpop.permute.xlu0 %1202
        %1204 = vset.pattern.permute.xlu0 0
        %1205 = vperm.xlu0 %1204, %v1108
        %v1206 = vpop.permute.xlu0 %1205
        %1207 = vset.pattern.permute.xlu0 0
        %1208 = vperm.xlu0 %1207, %v1109
        %v1209 = vpop.permute.xlu0 %1208
        %1210 = vset.pattern.permute.xlu0 0
        %1211 = vperm.xlu0 %1210, %v1110
        %v1212 = vpop.permute.xlu0 %1211
        %1213 = vset.pattern.permute.xlu0 0
        %1214 = vperm.xlu0 %1213, %v1111
        %v1215 = vpop.permute.xlu0 %1214
        %1216 = vset.pattern.permute.xlu0 0
        %1217 = vperm.xlu0 %1216, %v1112
        %v1218 = vpop.permute.xlu0 %1217
        %1219 = vset.pattern.permute.xlu0 0
        %1220 = vperm.xlu0 %1219, %v1113
        %v1221 = vpop.permute.xlu0 %1220
        %1222 = vset.pattern.permute.xlu0 0
        %1223 = vperm.xlu0 %1222, %v1114
        %v1224 = vpop.permute.xlu0 %1223
        %1225 = vset.pattern.permute.xlu0 0
        %1226 = vperm.xlu0 %1225, %v1115
        %v1227 = vpop.permute.xlu0 %1226
        %1228 = vset.pattern.permute.xlu0 0
        %1229 = vperm.xlu0 %1228, %v1116
        %v1230 = vpop.permute.xlu0 %1229
        %1231 = vset.pattern.permute.xlu0 0
        %1232 = vperm.xlu0 %1231, %v1117
        %v1233 = vpop.permute.xlu0 %1232
        %1234 = vset.pattern.permute.xlu0 0
        %1235 = vperm.xlu0 %1234, %v1118
        %v1236 = vpop.permute.xlu0 %1235
        %1237 = vset.pattern.permute.xlu0 0
        %1238 = vperm.xlu0 %1237, %v1119
        %v1239 = vpop.permute.xlu0 %1238
        %1240 = vset.pattern.permute.xlu0 0
        %1241 = vperm.xlu0 %1240, %v1120
        %v1242 = vpop.permute.xlu0 %1241
        %1243 = vset.pattern.permute.xlu0 0
        %1244 = vperm.xlu0 %1243, %v1121
        %v1245 = vpop.permute.xlu0 %1244
        %1246 = vset.pattern.permute.xlu0 0
        %1247 = vperm.xlu0 %1246, %v1122
        %v1248 = vpop.permute.xlu0 %1247
        %1249 = vset.pattern.permute.xlu0 0
        %1250 = vperm.xlu0 %1249, %v1123
        %v1251 = vpop.permute.xlu0 %1250
        %v1252 = vlaneseq
        %v1253 = vand.u32 %v1252, 127
        %v1254 = vlaneseq
        %v1255 = vshrl.u32 %v1254, 7
        %v1256 = vsub.s32 %v1253, %v1255
        %v1257 = vrot.slane %v1158, %v1256
        %v1258 = vadd.s32 %v1253, 4294967288
        %v1259 = vlaneseq
        %v1260 = vshrl.u32 %v1259, 7
        %v1261 = vsub.s32 %v1258, %v1260
        %v1262 = vrot.slane %v1161, %v1261
        %vm1263 = vcmask 130112
        %v1264 = vsel %vm1263, %v1262, %v1257
        %v1265 = vadd.s32 %v1253, 4294967280
        %v1266 = vlaneseq
        %v1267 = vshrl.u32 %v1266, 7
        %v1268 = vsub.s32 %v1265, %v1267
        %v1269 = vrot.slane %v1164, %v1268
        %vm1270 = vcmask 195712
        %v1271 = vsel %vm1270, %v1269, %v1264
        %v1272 = vadd.s32 %v1253, 4294967272
        %v1273 = vlaneseq
        %v1274 = vshrl.u32 %v1273, 7
        %v1275 = vsub.s32 %v1272, %v1274
        %v1276 = vrot.slane %v1167, %v1275
        %vm1277 = vcmask 261312
        %v1278 = vsel %vm1277, %v1276, %v1271
        %v1279 = vlaneseq
        %v1280 = vshrl.u32 %v1279, 7
        %v1281 = vsub.s32 %v1253, %v1280
        %v1282 = vrot.slane %v1170, %v1281
        %v1283 = vlaneseq
        %v1284 = vshrl.u32 %v1283, 7
        %v1285 = vsub.s32 %v1258, %v1284
        %v1286 = vrot.slane %v1173, %v1285
        %v1287 = vsel %vm1263, %v1286, %v1282
        %v1288 = vlaneseq
        %v1289 = vshrl.u32 %v1288, 7
        %v1290 = vsub.s32 %v1265, %v1289
        %v1291 = vrot.slane %v1176, %v1290
        %v1292 = vsel %vm1270, %v1291, %v1287
        %v1293 = vlaneseq
        %v1294 = vshrl.u32 %v1293, 7
        %v1295 = vsub.s32 %v1272, %v1294
        %v1296 = vrot.slane %v1179, %v1295
        %v1297 = vsel %vm1277, %v1296, %v1292
        %v1298 = vlaneseq
        %v1299 = vshrl.u32 %v1298, 7
        %v1300 = vsub.s32 %v1253, %v1299
        %v1301 = vrot.slane %v1182, %v1300
        %v1302 = vlaneseq
        %v1303 = vshrl.u32 %v1302, 7
        %v1304 = vsub.s32 %v1258, %v1303
        %v1305 = vrot.slane %v1185, %v1304
        %v1306 = vsel %vm1263, %v1305, %v1301
        %v1307 = vlaneseq
        %v1308 = vshrl.u32 %v1307, 7
        %v1309 = vsub.s32 %v1265, %v1308
        %v1310 = vrot.slane %v1188, %v1309
        %v1311 = vsel %vm1270, %v1310, %v1306
        %v1312 = vlaneseq
        %v1313 = vshrl.u32 %v1312, 7
        %v1314 = vsub.s32 %v1272, %v1313
        %v1315 = vrot.slane %v1191, %v1314
        %v1316 = vsel %vm1277, %v1315, %v1311
        %v1317 = vlaneseq
        %v1318 = vshrl.u32 %v1317, 7
        %v1319 = vsub.s32 %v1253, %v1318
        %v1320 = vrot.slane %v1194, %v1319
        %v1321 = vlaneseq
        %v1322 = vshrl.u32 %v1321, 7
        %v1323 = vsub.s32 %v1258, %v1322
        %v1324 = vrot.slane %v1197, %v1323
        %v1325 = vsel %vm1263, %v1324, %v1320
        %v1326 = vlaneseq
        %v1327 = vshrl.u32 %v1326, 7
        %v1328 = vsub.s32 %v1265, %v1327
        %v1329 = vrot.slane %v1200, %v1328
        %v1330 = vsel %vm1270, %v1329, %v1325
        %v1331 = vlaneseq
        %v1332 = vshrl.u32 %v1331, 7
        %v1333 = vsub.s32 %v1272, %v1332
        %v1334 = vrot.slane %v1203, %v1333
        %v1335 = vsel %vm1277, %v1334, %v1330
        %v1336 = vlaneseq
        %v1337 = vshrl.u32 %v1336, 7
        %v1338 = vsub.s32 %v1253, %v1337
        %v1339 = vrot.slane %v1206, %v1338
        %v1340 = vlaneseq
        %v1341 = vshrl.u32 %v1340, 7
        %v1342 = vsub.s32 %v1258, %v1341
        %v1343 = vrot.slane %v1209, %v1342
        %v1344 = vsel %vm1263, %v1343, %v1339
        %v1345 = vlaneseq
        %v1346 = vshrl.u32 %v1345, 7
        %v1347 = vsub.s32 %v1265, %v1346
        %v1348 = vrot.slane %v1212, %v1347
        %v1349 = vsel %vm1270, %v1348, %v1344
        %v1350 = vlaneseq
        %v1351 = vshrl.u32 %v1350, 7
        %v1352 = vsub.s32 %v1272, %v1351
        %v1353 = vrot.slane %v1215, %v1352
        %v1354 = vsel %vm1277, %v1353, %v1349
        %v1355 = vlaneseq
        %v1356 = vshrl.u32 %v1355, 7
        %v1357 = vsub.s32 %v1253, %v1356
        %v1358 = vrot.slane %v1218, %v1357
        %v1359 = vlaneseq
        %v1360 = vshrl.u32 %v1359, 7
        %v1361 = vsub.s32 %v1258, %v1360
        %v1362 = vrot.slane %v1221, %v1361
        %v1363 = vsel %vm1263, %v1362, %v1358
        %v1364 = vlaneseq
        %v1365 = vshrl.u32 %v1364, 7
        %v1366 = vsub.s32 %v1265, %v1365
        %v1367 = vrot.slane %v1224, %v1366
        %v1368 = vsel %vm1270, %v1367, %v1363
        %v1369 = vlaneseq
        %v1370 = vshrl.u32 %v1369, 7
        %v1371 = vsub.s32 %v1272, %v1370
        %v1372 = vrot.slane %v1227, %v1371
        %v1373 = vsel %vm1277, %v1372, %v1368
        %v1374 = vlaneseq
        %v1375 = vshrl.u32 %v1374, 7
        %v1376 = vsub.s32 %v1253, %v1375
        %v1377 = vrot.slane %v1230, %v1376
        %v1378 = vlaneseq
        %v1379 = vshrl.u32 %v1378, 7
        %v1380 = vsub.s32 %v1258, %v1379
        %v1381 = vrot.slane %v1233, %v1380
        %v1382 = vsel %vm1263, %v1381, %v1377
        %v1383 = vlaneseq
        %v1384 = vshrl.u32 %v1383, 7
        %v1385 = vsub.s32 %v1265, %v1384
        %v1386 = vrot.slane %v1236, %v1385
        %v1387 = vsel %vm1270, %v1386, %v1382
        %v1388 = vlaneseq
        %v1389 = vshrl.u32 %v1388, 7
        %v1390 = vsub.s32 %v1272, %v1389
        %v1391 = vrot.slane %v1239, %v1390
        %v1392 = vsel %vm1277, %v1391, %v1387
        %v1393 = vlaneseq
        %v1394 = vshrl.u32 %v1393, 7
        %v1395 = vsub.s32 %v1253, %v1394
        %v1396 = vrot.slane %v1242, %v1395
        %v1397 = vlaneseq
        %v1398 = vshrl.u32 %v1397, 7
        %v1399 = vsub.s32 %v1258, %v1398
        %v1400 = vrot.slane %v1245, %v1399
        %v1401 = vsel %vm1263, %v1400, %v1396
        %v1402 = vlaneseq
        %v1403 = vshrl.u32 %v1402, 7
        %v1404 = vsub.s32 %v1265, %v1403
        %v1405 = vrot.slane %v1248, %v1404
        %v1406 = vsel %vm1270, %v1405, %v1401
        %v1407 = vlaneseq
        %v1408 = vshrl.u32 %v1407, 7
        %v1409 = vsub.s32 %v1272, %v1408
        %v1410 = vrot.slane %v1251, %v1409
        %v1411 = vsel %vm1277, %v1410, %v1406
        %vm1412 = vcmask 1041409
        %v1413 = vsel %vm1412, %v1297, %v1278
        %vm1414 = vcmask 1042434
        %v1415 = vsel %vm1414, %v1316, %v1413
        %vm1416 = vcmask 1043459
        %v1417 = vsel %vm1416, %v1335, %v1415
        %vm1418 = vcmask 1044484
        %v1419 = vsel %vm1418, %v1354, %v1417
        %vm1420 = vcmask 1045509
        %v1421 = vsel %vm1420, %v1373, %v1419
        %vm1422 = vcmask 1046534
        %v1423 = vsel %vm1422, %v1392, %v1421
        %vm1424 = vcmask 1047559
        %v1425 = vsel %vm1424, %v1411, %v1423
        %vm1427 = vcmask 261120
        %v1428 = vsel %vm1427, %v1425, -inf
        %1429 = vmax.xlane.f32.xlu0 %v1428
        %v1430 = vpop.xlane.xlu0 %1429
        %v1432 = vlaneseq
        %v1433 = vshrl.u32 %v1432, 7
        %v1434 = vsub.s32 0, %v1433
        %v1435 = vrot.slane %v1430, %v1434
        %v1436 = vlaneseq
        %v1437 = vshrl.u32 %v1436, 7
        %v1438 = vsub.s32 1, %v1437
        %v1439 = vrot.slane %v1430, %v1438
        %v1440 = vlaneseq
        %v1441 = vshrl.u32 %v1440, 7
        %v1442 = vsub.s32 2, %v1441
        %v1443 = vrot.slane %v1430, %v1442
        %v1444 = vlaneseq
        %v1445 = vshrl.u32 %v1444, 7
        %v1446 = vsub.s32 3, %v1445
        %v1447 = vrot.slane %v1430, %v1446
        %v1448 = vlaneseq
        %v1449 = vshrl.u32 %v1448, 7
        %v1450 = vsub.s32 4, %v1449
        %v1451 = vrot.slane %v1430, %v1450
        %v1452 = vlaneseq
        %v1453 = vshrl.u32 %v1452, 7
        %v1454 = vsub.s32 5, %v1453
        %v1455 = vrot.slane %v1430, %v1454
        %v1456 = vlaneseq
        %v1457 = vshrl.u32 %v1456, 7
        %v1458 = vsub.s32 6, %v1457
        %v1459 = vrot.slane %v1430, %v1458
        %v1460 = vlaneseq
        %v1461 = vshrl.u32 %v1460, 7
        %v1462 = vsub.s32 7, %v1461
        %v1463 = vrot.slane %v1430, %v1462
        %v1472 = vsub.f32 %v1092, %v1435
        %v1473 = vsub.f32 %v1093, %v1435
        %v1474 = vsub.f32 %v1094, %v1435
        %v1475 = vsub.f32 %v1095, %v1435
        %v1476 = vsub.f32 %v1096, %v1439
        %v1477 = vsub.f32 %v1097, %v1439
        %v1478 = vsub.f32 %v1098, %v1439
        %v1479 = vsub.f32 %v1099, %v1439
        %v1480 = vsub.f32 %v1100, %v1443
        %v1481 = vsub.f32 %v1101, %v1443
        %v1482 = vsub.f32 %v1102, %v1443
        %v1483 = vsub.f32 %v1103, %v1443
        %v1484 = vsub.f32 %v1104, %v1447
        %v1485 = vsub.f32 %v1105, %v1447
        %v1486 = vsub.f32 %v1106, %v1447
        %v1487 = vsub.f32 %v1107, %v1447
        %v1488 = vsub.f32 %v1108, %v1451
        %v1489 = vsub.f32 %v1109, %v1451
        %v1490 = vsub.f32 %v1110, %v1451
        %v1491 = vsub.f32 %v1111, %v1451
        %v1492 = vsub.f32 %v1112, %v1455
        %v1493 = vsub.f32 %v1113, %v1455
        %v1494 = vsub.f32 %v1114, %v1455
        %v1495 = vsub.f32 %v1115, %v1455
        %v1496 = vsub.f32 %v1116, %v1459
        %v1497 = vsub.f32 %v1117, %v1459
        %v1498 = vsub.f32 %v1118, %v1459
        %v1499 = vsub.f32 %v1119, %v1459
        %v1500 = vsub.f32 %v1120, %v1463
        %v1501 = vsub.f32 %v1121, %v1463
        %v1502 = vsub.f32 %v1122, %v1463
        %v1503 = vsub.f32 %v1123, %v1463
        %v1504 = vmul.f32 %v1472, 1.442695
        %v1505 = vpow.pop %v1504
        %v1506 = vmul.f32 %v1473, 1.442695
        %v1507 = vpow.pop %v1506
        %v1508 = vmul.f32 %v1474, 1.442695
        %v1509 = vpow.pop %v1508
        %v1510 = vmul.f32 %v1475, 1.442695
        %v1511 = vpow.pop %v1510
        %v1512 = vmul.f32 %v1476, 1.442695
        %v1513 = vpow.pop %v1512
        %v1514 = vmul.f32 %v1477, 1.442695
        %v1515 = vpow.pop %v1514
        %v1516 = vmul.f32 %v1478, 1.442695
        %v1517 = vpow.pop %v1516
        %v1518 = vmul.f32 %v1479, 1.442695
        %v1519 = vpow.pop %v1518
        %v1520 = vmul.f32 %v1480, 1.442695
        %v1521 = vpow.pop %v1520
        %v1522 = vmul.f32 %v1481, 1.442695
        %v1523 = vpow.pop %v1522
        %v1524 = vmul.f32 %v1482, 1.442695
        %v1525 = vpow.pop %v1524
        %v1526 = vmul.f32 %v1483, 1.442695
        %v1527 = vpow.pop %v1526
        %v1528 = vmul.f32 %v1484, 1.442695
        %v1529 = vpow.pop %v1528
        %v1530 = vmul.f32 %v1485, 1.442695
        %v1531 = vpow.pop %v1530
        %v1532 = vmul.f32 %v1486, 1.442695
        %v1533 = vpow.pop %v1532
        %v1534 = vmul.f32 %v1487, 1.442695
        %v1535 = vpow.pop %v1534
        %v1536 = vmul.f32 %v1488, 1.442695
        %v1537 = vpow.pop %v1536
        %v1538 = vmul.f32 %v1489, 1.442695
        %v1539 = vpow.pop %v1538
        %v1540 = vmul.f32 %v1490, 1.442695
        %v1541 = vpow.pop %v1540
        %v1542 = vmul.f32 %v1491, 1.442695
        %v1543 = vpow.pop %v1542
        %v1544 = vmul.f32 %v1492, 1.442695
        %v1545 = vpow.pop %v1544
        %v1546 = vmul.f32 %v1493, 1.442695
        %v1547 = vpow.pop %v1546
        %v1548 = vmul.f32 %v1494, 1.442695
        %v1549 = vpow.pop %v1548
        %v1550 = vmul.f32 %v1495, 1.442695
        %v1551 = vpow.pop %v1550
        %v1552 = vmul.f32 %v1496, 1.442695
        %v1553 = vpow.pop %v1552
        %v1554 = vmul.f32 %v1497, 1.442695
        %v1555 = vpow.pop %v1554
        %v1556 = vmul.f32 %v1498, 1.442695
        %v1557 = vpow.pop %v1556
        %v1558 = vmul.f32 %v1499, 1.442695
        %v1559 = vpow.pop %v1558
        %v1560 = vmul.f32 %v1500, 1.442695
        %v1561 = vpow.pop %v1560
        %v1562 = vmul.f32 %v1501, 1.442695
        %v1563 = vpow.pop %v1562
        %v1564 = vmul.f32 %v1502, 1.442695
        %v1565 = vpow.pop %v1564
        %v1566 = vmul.f32 %v1503, 1.442695
        %v1567 = vpow.pop %v1566
        %1600 = vset.pattern.permute.xlu0 0
        %1601 = vperm.xlu0 %1600, %v1505
        %v1602 = vpop.permute.xlu0 %1601
        %1603 = vset.pattern.permute.xlu0 0
        %1604 = vperm.xlu0 %1603, %v1507
        %v1605 = vpop.permute.xlu0 %1604
        %1606 = vset.pattern.permute.xlu0 0
        %1607 = vperm.xlu0 %1606, %v1509
        %v1608 = vpop.permute.xlu0 %1607
        %1609 = vset.pattern.permute.xlu0 0
        %1610 = vperm.xlu0 %1609, %v1511
        %v1611 = vpop.permute.xlu0 %1610
        %1612 = vset.pattern.permute.xlu0 0
        %1613 = vperm.xlu0 %1612, %v1513
        %v1614 = vpop.permute.xlu0 %1613
        %1615 = vset.pattern.permute.xlu0 0
        %1616 = vperm.xlu0 %1615, %v1515
        %v1617 = vpop.permute.xlu0 %1616
        %1618 = vset.pattern.permute.xlu0 0
        %1619 = vperm.xlu0 %1618, %v1517
        %v1620 = vpop.permute.xlu0 %1619
        %1621 = vset.pattern.permute.xlu0 0
        %1622 = vperm.xlu0 %1621, %v1519
        %v1623 = vpop.permute.xlu0 %1622
        %1624 = vset.pattern.permute.xlu0 0
        %1625 = vperm.xlu0 %1624, %v1521
        %v1626 = vpop.permute.xlu0 %1625
        %1627 = vset.pattern.permute.xlu0 0
        %1628 = vperm.xlu0 %1627, %v1523
        %v1629 = vpop.permute.xlu0 %1628
        %1630 = vset.pattern.permute.xlu0 0
        %1631 = vperm.xlu0 %1630, %v1525
        %v1632 = vpop.permute.xlu0 %1631
        %1633 = vset.pattern.permute.xlu0 0
        %1634 = vperm.xlu0 %1633, %v1527
        %v1635 = vpop.permute.xlu0 %1634
        %1636 = vset.pattern.permute.xlu0 0
        %1637 = vperm.xlu0 %1636, %v1529
        %v1638 = vpop.permute.xlu0 %1637
        %1639 = vset.pattern.permute.xlu0 0
        %1640 = vperm.xlu0 %1639, %v1531
        %v1641 = vpop.permute.xlu0 %1640
        %1642 = vset.pattern.permute.xlu0 0
        %1643 = vperm.xlu0 %1642, %v1533
        %v1644 = vpop.permute.xlu0 %1643
        %1645 = vset.pattern.permute.xlu0 0
        %1646 = vperm.xlu0 %1645, %v1535
        %v1647 = vpop.permute.xlu0 %1646
        %1648 = vset.pattern.permute.xlu0 0
        %1649 = vperm.xlu0 %1648, %v1537
        %v1650 = vpop.permute.xlu0 %1649
        %1651 = vset.pattern.permute.xlu0 0
        %1652 = vperm.xlu0 %1651, %v1539
        %v1653 = vpop.permute.xlu0 %1652
        %1654 = vset.pattern.permute.xlu0 0
        %1655 = vperm.xlu0 %1654, %v1541
        %v1656 = vpop.permute.xlu0 %1655
        %1657 = vset.pattern.permute.xlu0 0
        %1658 = vperm.xlu0 %1657, %v1543
        %v1659 = vpop.permute.xlu0 %1658
        %1660 = vset.pattern.permute.xlu0 0
        %1661 = vperm.xlu0 %1660, %v1545
        %v1662 = vpop.permute.xlu0 %1661
        %1663 = vset.pattern.permute.xlu0 0
        %1664 = vperm.xlu0 %1663, %v1547
        %v1665 = vpop.permute.xlu0 %1664
        %1666 = vset.pattern.permute.xlu0 0
        %1667 = vperm.xlu0 %1666, %v1549
        %v1668 = vpop.permute.xlu0 %1667
        %1669 = vset.pattern.permute.xlu0 0
        %1670 = vperm.xlu0 %1669, %v1551
        %v1671 = vpop.permute.xlu0 %1670
        %1672 = vset.pattern.permute.xlu0 0
        %1673 = vperm.xlu0 %1672, %v1553
        %v1674 = vpop.permute.xlu0 %1673
        %1675 = vset.pattern.permute.xlu0 0
        %1676 = vperm.xlu0 %1675, %v1555
        %v1677 = vpop.permute.xlu0 %1676
        %1678 = vset.pattern.permute.xlu0 0
        %1679 = vperm.xlu0 %1678, %v1557
        %v1680 = vpop.permute.xlu0 %1679
        %1681 = vset.pattern.permute.xlu0 0
        %1682 = vperm.xlu0 %1681, %v1559
        %v1683 = vpop.permute.xlu0 %1682
        %1684 = vset.pattern.permute.xlu0 0
        %1685 = vperm.xlu0 %1684, %v1561
        %v1686 = vpop.permute.xlu0 %1685
        %1687 = vset.pattern.permute.xlu0 0
        %1688 = vperm.xlu0 %1687, %v1563
        %v1689 = vpop.permute.xlu0 %1688
        %1690 = vset.pattern.permute.xlu0 0
        %1691 = vperm.xlu0 %1690, %v1565
        %v1692 = vpop.permute.xlu0 %1691
        %1693 = vset.pattern.permute.xlu0 0
        %1694 = vperm.xlu0 %1693, %v1567
        %v1695 = vpop.permute.xlu0 %1694
        %v1696 = vlaneseq
        %v1697 = vshrl.u32 %v1696, 7
        %v1698 = vsub.s32 %v1253, %v1697
        %v1699 = vrot.slane %v1602, %v1698
        %v1700 = vlaneseq
        %v1701 = vshrl.u32 %v1700, 7
        %v1702 = vsub.s32 %v1258, %v1701
        %v1703 = vrot.slane %v1605, %v1702
        %v1704 = vsel %vm1263, %v1703, %v1699
        %v1705 = vlaneseq
        %v1706 = vshrl.u32 %v1705, 7
        %v1707 = vsub.s32 %v1265, %v1706
        %v1708 = vrot.slane %v1608, %v1707
        %v1709 = vsel %vm1270, %v1708, %v1704
        %v1710 = vlaneseq
        %v1711 = vshrl.u32 %v1710, 7
        %v1712 = vsub.s32 %v1272, %v1711
        %v1713 = vrot.slane %v1611, %v1712
        %v1714 = vsel %vm1277, %v1713, %v1709
        %v1715 = vlaneseq
        %v1716 = vshrl.u32 %v1715, 7
        %v1717 = vsub.s32 %v1253, %v1716
        %v1718 = vrot.slane %v1614, %v1717
        %v1719 = vlaneseq
        %v1720 = vshrl.u32 %v1719, 7
        %v1721 = vsub.s32 %v1258, %v1720
        %v1722 = vrot.slane %v1617, %v1721
        %v1723 = vsel %vm1263, %v1722, %v1718
        %v1724 = vlaneseq
        %v1725 = vshrl.u32 %v1724, 7
        %v1726 = vsub.s32 %v1265, %v1725
        %v1727 = vrot.slane %v1620, %v1726
        %v1728 = vsel %vm1270, %v1727, %v1723
        %v1729 = vlaneseq
        %v1730 = vshrl.u32 %v1729, 7
        %v1731 = vsub.s32 %v1272, %v1730
        %v1732 = vrot.slane %v1623, %v1731
        %v1733 = vsel %vm1277, %v1732, %v1728
        %v1734 = vlaneseq
        %v1735 = vshrl.u32 %v1734, 7
        %v1736 = vsub.s32 %v1253, %v1735
        %v1737 = vrot.slane %v1626, %v1736
        %v1738 = vlaneseq
        %v1739 = vshrl.u32 %v1738, 7
        %v1740 = vsub.s32 %v1258, %v1739
        %v1741 = vrot.slane %v1629, %v1740
        %v1742 = vsel %vm1263, %v1741, %v1737
        %v1743 = vlaneseq
        %v1744 = vshrl.u32 %v1743, 7
        %v1745 = vsub.s32 %v1265, %v1744
        %v1746 = vrot.slane %v1632, %v1745
        %v1747 = vsel %vm1270, %v1746, %v1742
        %v1748 = vlaneseq
        %v1749 = vshrl.u32 %v1748, 7
        %v1750 = vsub.s32 %v1272, %v1749
        %v1751 = vrot.slane %v1635, %v1750
        %v1752 = vsel %vm1277, %v1751, %v1747
        %v1753 = vlaneseq
        %v1754 = vshrl.u32 %v1753, 7
        %v1755 = vsub.s32 %v1253, %v1754
        %v1756 = vrot.slane %v1638, %v1755
        %v1757 = vlaneseq
        %v1758 = vshrl.u32 %v1757, 7
        %v1759 = vsub.s32 %v1258, %v1758
        %v1760 = vrot.slane %v1641, %v1759
        %v1761 = vsel %vm1263, %v1760, %v1756
        %v1762 = vlaneseq
        %v1763 = vshrl.u32 %v1762, 7
        %v1764 = vsub.s32 %v1265, %v1763
        %v1765 = vrot.slane %v1644, %v1764
        %v1766 = vsel %vm1270, %v1765, %v1761
        %v1767 = vlaneseq
        %v1768 = vshrl.u32 %v1767, 7
        %v1769 = vsub.s32 %v1272, %v1768
        %v1770 = vrot.slane %v1647, %v1769
        %v1771 = vsel %vm1277, %v1770, %v1766
        %v1772 = vlaneseq
        %v1773 = vshrl.u32 %v1772, 7
        %v1774 = vsub.s32 %v1253, %v1773
        %v1775 = vrot.slane %v1650, %v1774
        %v1776 = vlaneseq
        %v1777 = vshrl.u32 %v1776, 7
        %v1778 = vsub.s32 %v1258, %v1777
        %v1779 = vrot.slane %v1653, %v1778
        %v1780 = vsel %vm1263, %v1779, %v1775
        %v1781 = vlaneseq
        %v1782 = vshrl.u32 %v1781, 7
        %v1783 = vsub.s32 %v1265, %v1782
        %v1784 = vrot.slane %v1656, %v1783
        %v1785 = vsel %vm1270, %v1784, %v1780
        %v1786 = vlaneseq
        %v1787 = vshrl.u32 %v1786, 7
        %v1788 = vsub.s32 %v1272, %v1787
        %v1789 = vrot.slane %v1659, %v1788
        %v1790 = vsel %vm1277, %v1789, %v1785
        %v1791 = vlaneseq
        %v1792 = vshrl.u32 %v1791, 7
        %v1793 = vsub.s32 %v1253, %v1792
        %v1794 = vrot.slane %v1662, %v1793
        %v1795 = vlaneseq
        %v1796 = vshrl.u32 %v1795, 7
        %v1797 = vsub.s32 %v1258, %v1796
        %v1798 = vrot.slane %v1665, %v1797
        %v1799 = vsel %vm1263, %v1798, %v1794
        %v1800 = vlaneseq
        %v1801 = vshrl.u32 %v1800, 7
        %v1802 = vsub.s32 %v1265, %v1801
        %v1803 = vrot.slane %v1668, %v1802
        %v1804 = vsel %vm1270, %v1803, %v1799
        %v1805 = vlaneseq
        %v1806 = vshrl.u32 %v1805, 7
        %v1807 = vsub.s32 %v1272, %v1806
        %v1808 = vrot.slane %v1671, %v1807
        %v1809 = vsel %vm1277, %v1808, %v1804
        %v1810 = vlaneseq
        %v1811 = vshrl.u32 %v1810, 7
        %v1812 = vsub.s32 %v1253, %v1811
        %v1813 = vrot.slane %v1674, %v1812
        %v1814 = vlaneseq
        %v1815 = vshrl.u32 %v1814, 7
        %v1816 = vsub.s32 %v1258, %v1815
        %v1817 = vrot.slane %v1677, %v1816
        %v1818 = vsel %vm1263, %v1817, %v1813
        %v1819 = vlaneseq
        %v1820 = vshrl.u32 %v1819, 7
        %v1821 = vsub.s32 %v1265, %v1820
        %v1822 = vrot.slane %v1680, %v1821
        %v1823 = vsel %vm1270, %v1822, %v1818
        %v1824 = vlaneseq
        %v1825 = vshrl.u32 %v1824, 7
        %v1826 = vsub.s32 %v1272, %v1825
        %v1827 = vrot.slane %v1683, %v1826
        %v1828 = vsel %vm1277, %v1827, %v1823
        %v1829 = vlaneseq
        %v1830 = vshrl.u32 %v1829, 7
        %v1831 = vsub.s32 %v1253, %v1830
        %v1832 = vrot.slane %v1686, %v1831
        %v1833 = vlaneseq
        %v1834 = vshrl.u32 %v1833, 7
        %v1835 = vsub.s32 %v1258, %v1834
        %v1836 = vrot.slane %v1689, %v1835
        %v1837 = vsel %vm1263, %v1836, %v1832
        %v1838 = vlaneseq
        %v1839 = vshrl.u32 %v1838, 7
        %v1840 = vsub.s32 %v1265, %v1839
        %v1841 = vrot.slane %v1692, %v1840
        %v1842 = vsel %vm1270, %v1841, %v1837
        %v1843 = vlaneseq
        %v1844 = vshrl.u32 %v1843, 7
        %v1845 = vsub.s32 %v1272, %v1844
        %v1846 = vrot.slane %v1695, %v1845
        %v1847 = vsel %vm1277, %v1846, %v1842
        %v1848 = vsel %vm1412, %v1733, %v1714
        %v1849 = vsel %vm1414, %v1752, %v1848
        %v1850 = vsel %vm1416, %v1771, %v1849
        %v1851 = vsel %vm1418, %v1790, %v1850
        %v1852 = vsel %vm1420, %v1809, %v1851
        %v1853 = vsel %vm1422, %v1828, %v1852
        %v1854 = vsel %vm1424, %v1847, %v1853
        %v1856 = vsel %vm1427, %v1854, 0.0
        %1857 = vadd.xlane.f32.xlu0 %v1856
        %v1858 = vpop.xlane.xlu0 %1857
        %v1859 = vrcp.pop %v1858
        %v1861 = vlaneseq
        %v1862 = vshrl.u32 %v1861, 7
        %v1863 = vsub.s32 0, %v1862
        %v1864 = vrot.slane %v1859, %v1863
        %v1865 = vlaneseq
        %v1866 = vshrl.u32 %v1865, 7
        %v1867 = vsub.s32 1, %v1866
        %v1868 = vrot.slane %v1859, %v1867
        %v1869 = vlaneseq
        %v1870 = vshrl.u32 %v1869, 7
        %v1871 = vsub.s32 2, %v1870
        %v1872 = vrot.slane %v1859, %v1871
        %v1873 = vlaneseq
        %v1874 = vshrl.u32 %v1873, 7
        %v1875 = vsub.s32 3, %v1874
        %v1876 = vrot.slane %v1859, %v1875
        %v1877 = vlaneseq
        %v1878 = vshrl.u32 %v1877, 7
        %v1879 = vsub.s32 4, %v1878
        %v1880 = vrot.slane %v1859, %v1879
        %v1881 = vlaneseq
        %v1882 = vshrl.u32 %v1881, 7
        %v1883 = vsub.s32 5, %v1882
        %v1884 = vrot.slane %v1859, %v1883
        %v1885 = vlaneseq
        %v1886 = vshrl.u32 %v1885, 7
        %v1887 = vsub.s32 6, %v1886
        %v1888 = vrot.slane %v1859, %v1887
        %v1889 = vlaneseq
        %v1890 = vshrl.u32 %v1889, 7
        %v1891 = vsub.s32 7, %v1890
        %v1892 = vrot.slane %v1859, %v1891
        %v1901 = vmul.f32 %v1505, %v1864
        %v1902 = vmul.f32 %v1507, %v1864
        %v1903 = vmul.f32 %v1509, %v1864
        %v1904 = vmul.f32 %v1511, %v1864
        %v1905 = vmul.f32 %v1513, %v1868
        %v1906 = vmul.f32 %v1515, %v1868
        %v1907 = vmul.f32 %v1517, %v1868
        %v1908 = vmul.f32 %v1519, %v1868
        %v1909 = vmul.f32 %v1521, %v1872
        %v1910 = vmul.f32 %v1523, %v1872
        %v1911 = vmul.f32 %v1525, %v1872
        %v1912 = vmul.f32 %v1527, %v1872
        %v1913 = vmul.f32 %v1529, %v1876
        %v1914 = vmul.f32 %v1531, %v1876
        %v1915 = vmul.f32 %v1533, %v1876
        %v1916 = vmul.f32 %v1535, %v1876
        %v1917 = vmul.f32 %v1537, %v1880
        %v1918 = vmul.f32 %v1539, %v1880
        %v1919 = vmul.f32 %v1541, %v1880
        %v1920 = vmul.f32 %v1543, %v1880
        %v1921 = vmul.f32 %v1545, %v1884
        %v1922 = vmul.f32 %v1547, %v1884
        %v1923 = vmul.f32 %v1549, %v1884
        %v1924 = vmul.f32 %v1551, %v1884
        %v1925 = vmul.f32 %v1553, %v1888
        %v1926 = vmul.f32 %v1555, %v1888
        %v1927 = vmul.f32 %v1557, %v1888
        %v1928 = vmul.f32 %v1559, %v1888
        %v1929 = vmul.f32 %v1561, %v1892
        %v1930 = vmul.f32 %v1563, %v1892
        %v1931 = vmul.f32 %v1565, %v1892
        %v1932 = vmul.f32 %v1567, %v1892
        %v1933 = vlaneseq
        %v1934 = vshrl.u32 %v1933, 7
        %v1935 = vadd.s32 %v1253, 128
        %v1936 = vmul.u32 %v1934, 32
        %vm1937 = vcmp.ge.s32.totalorder %v1253, %v1936
        %vm1938 = vcmp.ge.s32.totalorder %v1935, %v1936
        %v1939 = vadd.s32 %v1936, 32
        %vm1940 = vcmp.lt.s32.totalorder %v1253, %v1939
        %vm1941 = vcmp.lt.s32.totalorder %v1935, %v1939
        %vm1942 = vmand %vm1937, %vm1940
        %vm1943 = vmand %vm1938, %vm1941
        %1976 = vset.pattern.permute.xlu0 0
        %1977 = vperm.xlu0 %1976, %v1901
        %v1978 = vpop.permute.xlu0 %1977
        %1979 = vset.pattern.permute.xlu0 0
        %1980 = vperm.xlu0 %1979, %v1902
        %v1981 = vpop.permute.xlu0 %1980
        %1982 = vset.pattern.permute.xlu0 0
        %1983 = vperm.xlu0 %1982, %v1903
        %v1984 = vpop.permute.xlu0 %1983
        %1985 = vset.pattern.permute.xlu0 0
        %1986 = vperm.xlu0 %1985, %v1904
        %v1987 = vpop.permute.xlu0 %1986
        %1988 = vset.pattern.permute.xlu0 0
        %1989 = vperm.xlu0 %1988, %v1905
        %v1990 = vpop.permute.xlu0 %1989
        %1991 = vset.pattern.permute.xlu0 0
        %1992 = vperm.xlu0 %1991, %v1906
        %v1993 = vpop.permute.xlu0 %1992
        %1994 = vset.pattern.permute.xlu0 0
        %1995 = vperm.xlu0 %1994, %v1907
        %v1996 = vpop.permute.xlu0 %1995
        %1997 = vset.pattern.permute.xlu0 0
        %1998 = vperm.xlu0 %1997, %v1908
        %v1999 = vpop.permute.xlu0 %1998
        %2000 = vset.pattern.permute.xlu0 0
        %2001 = vperm.xlu0 %2000, %v1909
        %v2002 = vpop.permute.xlu0 %2001
        %2003 = vset.pattern.permute.xlu0 0
        %2004 = vperm.xlu0 %2003, %v1910
        %v2005 = vpop.permute.xlu0 %2004
        %2006 = vset.pattern.permute.xlu0 0
        %2007 = vperm.xlu0 %2006, %v1911
        %v2008 = vpop.permute.xlu0 %2007
        %2009 = vset.pattern.permute.xlu0 0
        %2010 = vperm.xlu0 %2009, %v1912
        %v2011 = vpop.permute.xlu0 %2010
        %2012 = vset.pattern.permute.xlu0 0
        %2013 = vperm.xlu0 %2012, %v1913
        %v2014 = vpop.permute.xlu0 %2013
        %2015 = vset.pattern.permute.xlu0 0
        %2016 = vperm.xlu0 %2015, %v1914
        %v2017 = vpop.permute.xlu0 %2016
        %2018 = vset.pattern.permute.xlu0 0
        %2019 = vperm.xlu0 %2018, %v1915
        %v2020 = vpop.permute.xlu0 %2019
        %2021 = vset.pattern.permute.xlu0 0
        %2022 = vperm.xlu0 %2021, %v1916
        %v2023 = vpop.permute.xlu0 %2022
        %2024 = vset.pattern.permute.xlu0 0
        %2025 = vperm.xlu0 %2024, %v1917
        %v2026 = vpop.permute.xlu0 %2025
        %2027 = vset.pattern.permute.xlu0 0
        %2028 = vperm.xlu0 %2027, %v1918
        %v2029 = vpop.permute.xlu0 %2028
        %2030 = vset.pattern.permute.xlu0 0
        %2031 = vperm.xlu0 %2030, %v1919
        %v2032 = vpop.permute.xlu0 %2031
        %2033 = vset.pattern.permute.xlu0 0
        %2034 = vperm.xlu0 %2033, %v1920
        %v2035 = vpop.permute.xlu0 %2034
        %2036 = vset.pattern.permute.xlu0 0
        %2037 = vperm.xlu0 %2036, %v1921
        %v2038 = vpop.permute.xlu0 %2037
        %2039 = vset.pattern.permute.xlu0 0
        %2040 = vperm.xlu0 %2039, %v1922
        %v2041 = vpop.permute.xlu0 %2040
        %2042 = vset.pattern.permute.xlu0 0
        %2043 = vperm.xlu0 %2042, %v1923
        %v2044 = vpop.permute.xlu0 %2043
        %2045 = vset.pattern.permute.xlu0 0
        %2046 = vperm.xlu0 %2045, %v1924
        %v2047 = vpop.permute.xlu0 %2046
        %2048 = vset.pattern.permute.xlu0 0
        %2049 = vperm.xlu0 %2048, %v1925
        %v2050 = vpop.permute.xlu0 %2049
        %2051 = vset.pattern.permute.xlu0 0
        %2052 = vperm.xlu0 %2051, %v1926
        %v2053 = vpop.permute.xlu0 %2052
        %2054 = vset.pattern.permute.xlu0 0
        %2055 = vperm.xlu0 %2054, %v1927
        %v2056 = vpop.permute.xlu0 %2055
        %2057 = vset.pattern.permute.xlu0 0
        %2058 = vperm.xlu0 %2057, %v1928
        %v2059 = vpop.permute.xlu0 %2058
        %2060 = vset.pattern.permute.xlu0 0
        %2061 = vperm.xlu0 %2060, %v1929
        %v2062 = vpop.permute.xlu0 %2061
        %2063 = vset.pattern.permute.xlu0 0
        %2064 = vperm.xlu0 %2063, %v1930
        %v2065 = vpop.permute.xlu0 %2064
        %2066 = vset.pattern.permute.xlu0 0
        %2067 = vperm.xlu0 %2066, %v1931
        %v2068 = vpop.permute.xlu0 %2067
        %2069 = vset.pattern.permute.xlu0 0
        %2070 = vperm.xlu0 %2069, %v1932
        %v2071 = vpop.permute.xlu0 %2070
        %v2072 = vlaneseq
        %v2073 = vshrl.u32 %v2072, 7
        %v2074 = vsub.s32 %v1253, %v2073
        %v2075 = vrot.slane %v1978, %v2074
        %v2076 = vlaneseq
        %v2077 = vshrl.u32 %v2076, 7
        %v2078 = vsub.s32 %v1258, %v2077
        %v2079 = vrot.slane %v1981, %v2078
        %v2080 = vsel %vm1263, %v2079, %v2075
        %v2081 = vlaneseq
        %v2082 = vshrl.u32 %v2081, 7
        %v2083 = vsub.s32 %v1265, %v2082
        %v2084 = vrot.slane %v1984, %v2083
        %v2085 = vsel %vm1270, %v2084, %v2080
        %v2086 = vlaneseq
        %v2087 = vshrl.u32 %v2086, 7
        %v2088 = vsub.s32 %v1272, %v2087
        %v2089 = vrot.slane %v1987, %v2088
        %v2090 = vsel %vm1277, %v2089, %v2085
        %v2091 = vlaneseq
        %v2092 = vshrl.u32 %v2091, 7
        %v2093 = vsub.s32 %v1253, %v2092
        %v2094 = vrot.slane %v1990, %v2093
        %v2095 = vlaneseq
        %v2096 = vshrl.u32 %v2095, 7
        %v2097 = vsub.s32 %v1258, %v2096
        %v2098 = vrot.slane %v1993, %v2097
        %v2099 = vsel %vm1263, %v2098, %v2094
        %v2100 = vlaneseq
        %v2101 = vshrl.u32 %v2100, 7
        %v2102 = vsub.s32 %v1265, %v2101
        %v2103 = vrot.slane %v1996, %v2102
        %v2104 = vsel %vm1270, %v2103, %v2099
        %v2105 = vlaneseq
        %v2106 = vshrl.u32 %v2105, 7
        %v2107 = vsub.s32 %v1272, %v2106
        %v2108 = vrot.slane %v1999, %v2107
        %v2109 = vsel %vm1277, %v2108, %v2104
        %v2110 = vlaneseq
        %v2111 = vshrl.u32 %v2110, 7
        %v2112 = vsub.s32 %v1253, %v2111
        %v2113 = vrot.slane %v2002, %v2112
        %v2114 = vlaneseq
        %v2115 = vshrl.u32 %v2114, 7
        %v2116 = vsub.s32 %v1258, %v2115
        %v2117 = vrot.slane %v2005, %v2116
        %v2118 = vsel %vm1263, %v2117, %v2113
        %v2119 = vlaneseq
        %v2120 = vshrl.u32 %v2119, 7
        %v2121 = vsub.s32 %v1265, %v2120
        %v2122 = vrot.slane %v2008, %v2121
        %v2123 = vsel %vm1270, %v2122, %v2118
        %v2124 = vlaneseq
        %v2125 = vshrl.u32 %v2124, 7
        %v2126 = vsub.s32 %v1272, %v2125
        %v2127 = vrot.slane %v2011, %v2126
        %v2128 = vsel %vm1277, %v2127, %v2123
        %v2129 = vlaneseq
        %v2130 = vshrl.u32 %v2129, 7
        %v2131 = vsub.s32 %v1253, %v2130
        %v2132 = vrot.slane %v2014, %v2131
        %v2133 = vlaneseq
        %v2134 = vshrl.u32 %v2133, 7
        %v2135 = vsub.s32 %v1258, %v2134
        %v2136 = vrot.slane %v2017, %v2135
        %v2137 = vsel %vm1263, %v2136, %v2132
        %v2138 = vlaneseq
        %v2139 = vshrl.u32 %v2138, 7
        %v2140 = vsub.s32 %v1265, %v2139
        %v2141 = vrot.slane %v2020, %v2140
        %v2142 = vsel %vm1270, %v2141, %v2137
        %v2143 = vlaneseq
        %v2144 = vshrl.u32 %v2143, 7
        %v2145 = vsub.s32 %v1272, %v2144
        %v2146 = vrot.slane %v2023, %v2145
        %v2147 = vsel %vm1277, %v2146, %v2142
        %v2148 = vlaneseq
        %v2149 = vshrl.u32 %v2148, 7
        %v2150 = vsub.s32 %v1253, %v2149
        %v2151 = vrot.slane %v2026, %v2150
        %v2152 = vlaneseq
        %v2153 = vshrl.u32 %v2152, 7
        %v2154 = vsub.s32 %v1258, %v2153
        %v2155 = vrot.slane %v2029, %v2154
        %v2156 = vsel %vm1263, %v2155, %v2151
        %v2157 = vlaneseq
        %v2158 = vshrl.u32 %v2157, 7
        %v2159 = vsub.s32 %v1265, %v2158
        %v2160 = vrot.slane %v2032, %v2159
        %v2161 = vsel %vm1270, %v2160, %v2156
        %v2162 = vlaneseq
        %v2163 = vshrl.u32 %v2162, 7
        %v2164 = vsub.s32 %v1272, %v2163
        %v2165 = vrot.slane %v2035, %v2164
        %v2166 = vsel %vm1277, %v2165, %v2161
        %v2167 = vlaneseq
        %v2168 = vshrl.u32 %v2167, 7
        %v2169 = vsub.s32 %v1253, %v2168
        %v2170 = vrot.slane %v2038, %v2169
        %v2171 = vlaneseq
        %v2172 = vshrl.u32 %v2171, 7
        %v2173 = vsub.s32 %v1258, %v2172
        %v2174 = vrot.slane %v2041, %v2173
        %v2175 = vsel %vm1263, %v2174, %v2170
        %v2176 = vlaneseq
        %v2177 = vshrl.u32 %v2176, 7
        %v2178 = vsub.s32 %v1265, %v2177
        %v2179 = vrot.slane %v2044, %v2178
        %v2180 = vsel %vm1270, %v2179, %v2175
        %v2181 = vlaneseq
        %v2182 = vshrl.u32 %v2181, 7
        %v2183 = vsub.s32 %v1272, %v2182
        %v2184 = vrot.slane %v2047, %v2183
        %v2185 = vsel %vm1277, %v2184, %v2180
        %v2186 = vlaneseq
        %v2187 = vshrl.u32 %v2186, 7
        %v2188 = vsub.s32 %v1253, %v2187
        %v2189 = vrot.slane %v2050, %v2188
        %v2190 = vlaneseq
        %v2191 = vshrl.u32 %v2190, 7
        %v2192 = vsub.s32 %v1258, %v2191
        %v2193 = vrot.slane %v2053, %v2192
        %v2194 = vsel %vm1263, %v2193, %v2189
        %v2195 = vlaneseq
        %v2196 = vshrl.u32 %v2195, 7
        %v2197 = vsub.s32 %v1265, %v2196
        %v2198 = vrot.slane %v2056, %v2197
        %v2199 = vsel %vm1270, %v2198, %v2194
        %v2200 = vlaneseq
        %v2201 = vshrl.u32 %v2200, 7
        %v2202 = vsub.s32 %v1272, %v2201
        %v2203 = vrot.slane %v2059, %v2202
        %v2204 = vsel %vm1277, %v2203, %v2199
        %v2205 = vlaneseq
        %v2206 = vshrl.u32 %v2205, 7
        %v2207 = vsub.s32 %v1253, %v2206
        %v2208 = vrot.slane %v2062, %v2207
        %v2209 = vlaneseq
        %v2210 = vshrl.u32 %v2209, 7
        %v2211 = vsub.s32 %v1258, %v2210
        %v2212 = vrot.slane %v2065, %v2211
        %v2213 = vsel %vm1263, %v2212, %v2208
        %v2214 = vlaneseq
        %v2215 = vshrl.u32 %v2214, 7
        %v2216 = vsub.s32 %v1265, %v2215
        %v2217 = vrot.slane %v2068, %v2216
        %v2218 = vsel %vm1270, %v2217, %v2213
        %v2219 = vlaneseq
        %v2220 = vshrl.u32 %v2219, 7
        %v2221 = vsub.s32 %v1272, %v2220
        %v2222 = vrot.slane %v2071, %v2221
        %v2223 = vsel %vm1277, %v2222, %v2218
        %v2224 = vsel %vm1412, %v2109, %v2090
        %v2225 = vsel %vm1414, %v2128, %v2224
        %v2226 = vsel %vm1416, %v2147, %v2225
        %v2227 = vsel %vm1418, %v2166, %v2226
        %v2228 = vsel %vm1420, %v2185, %v2227
        %v2229 = vsel %vm1422, %v2204, %v2228
        %v2230 = vsel %vm1424, %v2223, %v2229
        %v2232 = vadd.s32 %v1253, 4294967264
        %v2233 = vlaneseq
        %v2234 = vshrl.u32 %v2233, 7
        %v2235 = vsub.s32 %v2232, %v2234
        %v2236 = vrot.slane %v1978, %v2235
        %v2237 = vadd.s32 %v1253, 4294967256
        %v2238 = vlaneseq
        %v2239 = vshrl.u32 %v2238, 7
        %v2240 = vsub.s32 %v2237, %v2239
        %v2241 = vrot.slane %v1981, %v2240
        %vm2242 = vcmask 392512
        %v2243 = vsel %vm2242, %v2241, %v2236
        %v2244 = vadd.s32 %v1253, 4294967248
        %v2245 = vlaneseq
        %v2246 = vshrl.u32 %v2245, 7
        %v2247 = vsub.s32 %v2244, %v2246
        %v2248 = vrot.slane %v1984, %v2247
        %vm2249 = vcmask 458112
        %v2250 = vsel %vm2249, %v2248, %v2243
        %v2251 = vadd.s32 %v1253, 4294967240
        %v2252 = vlaneseq
        %v2253 = vshrl.u32 %v2252, 7
        %v2254 = vsub.s32 %v2251, %v2253
        %v2255 = vrot.slane %v1987, %v2254
        %vm2256 = vcmask 523712
        %v2257 = vsel %vm2256, %v2255, %v2250
        %v2258 = vlaneseq
        %v2259 = vshrl.u32 %v2258, 7
        %v2260 = vsub.s32 %v2232, %v2259
        %v2261 = vrot.slane %v1990, %v2260
        %v2262 = vlaneseq
        %v2263 = vshrl.u32 %v2262, 7
        %v2264 = vsub.s32 %v2237, %v2263
        %v2265 = vrot.slane %v1993, %v2264
        %v2266 = vsel %vm2242, %v2265, %v2261
        %v2267 = vlaneseq
        %v2268 = vshrl.u32 %v2267, 7
        %v2269 = vsub.s32 %v2244, %v2268
        %v2270 = vrot.slane %v1996, %v2269
        %v2271 = vsel %vm2249, %v2270, %v2266
        %v2272 = vlaneseq
        %v2273 = vshrl.u32 %v2272, 7
        %v2274 = vsub.s32 %v2251, %v2273
        %v2275 = vrot.slane %v1999, %v2274
        %v2276 = vsel %vm2256, %v2275, %v2271
        %v2277 = vlaneseq
        %v2278 = vshrl.u32 %v2277, 7
        %v2279 = vsub.s32 %v2232, %v2278
        %v2280 = vrot.slane %v2002, %v2279
        %v2281 = vlaneseq
        %v2282 = vshrl.u32 %v2281, 7
        %v2283 = vsub.s32 %v2237, %v2282
        %v2284 = vrot.slane %v2005, %v2283
        %v2285 = vsel %vm2242, %v2284, %v2280
        %v2286 = vlaneseq
        %v2287 = vshrl.u32 %v2286, 7
        %v2288 = vsub.s32 %v2244, %v2287
        %v2289 = vrot.slane %v2008, %v2288
        %v2290 = vsel %vm2249, %v2289, %v2285
        %v2291 = vlaneseq
        %v2292 = vshrl.u32 %v2291, 7
        %v2293 = vsub.s32 %v2251, %v2292
        %v2294 = vrot.slane %v2011, %v2293
        %v2295 = vsel %vm2256, %v2294, %v2290
        %v2296 = vlaneseq
        %v2297 = vshrl.u32 %v2296, 7
        %v2298 = vsub.s32 %v2232, %v2297
        %v2299 = vrot.slane %v2014, %v2298
        %v2300 = vlaneseq
        %v2301 = vshrl.u32 %v2300, 7
        %v2302 = vsub.s32 %v2237, %v2301
        %v2303 = vrot.slane %v2017, %v2302
        %v2304 = vsel %vm2242, %v2303, %v2299
        %v2305 = vlaneseq
        %v2306 = vshrl.u32 %v2305, 7
        %v2307 = vsub.s32 %v2244, %v2306
        %v2308 = vrot.slane %v2020, %v2307
        %v2309 = vsel %vm2249, %v2308, %v2304
        %v2310 = vlaneseq
        %v2311 = vshrl.u32 %v2310, 7
        %v2312 = vsub.s32 %v2251, %v2311
        %v2313 = vrot.slane %v2023, %v2312
        %v2314 = vsel %vm2256, %v2313, %v2309
        %v2315 = vlaneseq
        %v2316 = vshrl.u32 %v2315, 7
        %v2317 = vsub.s32 %v2232, %v2316
        %v2318 = vrot.slane %v2026, %v2317
        %v2319 = vlaneseq
        %v2320 = vshrl.u32 %v2319, 7
        %v2321 = vsub.s32 %v2237, %v2320
        %v2322 = vrot.slane %v2029, %v2321
        %v2323 = vsel %vm2242, %v2322, %v2318
        %v2324 = vlaneseq
        %v2325 = vshrl.u32 %v2324, 7
        %v2326 = vsub.s32 %v2244, %v2325
        %v2327 = vrot.slane %v2032, %v2326
        %v2328 = vsel %vm2249, %v2327, %v2323
        %v2329 = vlaneseq
        %v2330 = vshrl.u32 %v2329, 7
        %v2331 = vsub.s32 %v2251, %v2330
        %v2332 = vrot.slane %v2035, %v2331
        %v2333 = vsel %vm2256, %v2332, %v2328
        %v2334 = vlaneseq
        %v2335 = vshrl.u32 %v2334, 7
        %v2336 = vsub.s32 %v2232, %v2335
        %v2337 = vrot.slane %v2038, %v2336
        %v2338 = vlaneseq
        %v2339 = vshrl.u32 %v2338, 7
        %v2340 = vsub.s32 %v2237, %v2339
        %v2341 = vrot.slane %v2041, %v2340
        %v2342 = vsel %vm2242, %v2341, %v2337
        %v2343 = vlaneseq
        %v2344 = vshrl.u32 %v2343, 7
        %v2345 = vsub.s32 %v2244, %v2344
        %v2346 = vrot.slane %v2044, %v2345
        %v2347 = vsel %vm2249, %v2346, %v2342
        %v2348 = vlaneseq
        %v2349 = vshrl.u32 %v2348, 7
        %v2350 = vsub.s32 %v2251, %v2349
        %v2351 = vrot.slane %v2047, %v2350
        %v2352 = vsel %vm2256, %v2351, %v2347
        %v2353 = vlaneseq
        %v2354 = vshrl.u32 %v2353, 7
        %v2355 = vsub.s32 %v2232, %v2354
        %v2356 = vrot.slane %v2050, %v2355
        %v2357 = vlaneseq
        %v2358 = vshrl.u32 %v2357, 7
        %v2359 = vsub.s32 %v2237, %v2358
        %v2360 = vrot.slane %v2053, %v2359
        %v2361 = vsel %vm2242, %v2360, %v2356
        %v2362 = vlaneseq
        %v2363 = vshrl.u32 %v2362, 7
        %v2364 = vsub.s32 %v2244, %v2363
        %v2365 = vrot.slane %v2056, %v2364
        %v2366 = vsel %vm2249, %v2365, %v2361
        %v2367 = vlaneseq
        %v2368 = vshrl.u32 %v2367, 7
        %v2369 = vsub.s32 %v2251, %v2368
        %v2370 = vrot.slane %v2059, %v2369
        %v2371 = vsel %vm2256, %v2370, %v2366
        %v2372 = vlaneseq
        %v2373 = vshrl.u32 %v2372, 7
        %v2374 = vsub.s32 %v2232, %v2373
        %v2375 = vrot.slane %v2062, %v2374
        %v2376 = vlaneseq
        %v2377 = vshrl.u32 %v2376, 7
        %v2378 = vsub.s32 %v2237, %v2377
        %v2379 = vrot.slane %v2065, %v2378
        %v2380 = vsel %vm2242, %v2379, %v2375
        %v2381 = vlaneseq
        %v2382 = vshrl.u32 %v2381, 7
        %v2383 = vsub.s32 %v2244, %v2382
        %v2384 = vrot.slane %v2068, %v2383
        %v2385 = vsel %vm2249, %v2384, %v2380
        %v2386 = vlaneseq
        %v2387 = vshrl.u32 %v2386, 7
        %v2388 = vsub.s32 %v2251, %v2387
        %v2389 = vrot.slane %v2071, %v2388
        %v2390 = vsel %vm2256, %v2389, %v2385
        %v2391 = vsel %vm1412, %v2276, %v2257
        %v2392 = vsel %vm1414, %v2295, %v2391
        %v2393 = vsel %vm1416, %v2314, %v2392
        %v2394 = vsel %vm1418, %v2333, %v2393
        %v2395 = vsel %vm1420, %v2352, %v2394
        %v2396 = vsel %vm1422, %v2371, %v2395
        %v2397 = vsel %vm1424, %v2390, %v2396
        %v2399 = vadd.s32 %v1253, 4294967232
        %v2400 = vlaneseq
        %v2401 = vshrl.u32 %v2400, 7
        %v2402 = vsub.s32 %v2399, %v2401
        %v2403 = vrot.slane %v1978, %v2402
        %v2404 = vadd.s32 %v1253, 4294967224
        %v2405 = vlaneseq
        %v2406 = vshrl.u32 %v2405, 7
        %v2407 = vsub.s32 %v2404, %v2406
        %v2408 = vrot.slane %v1981, %v2407
        %vm2409 = vcmask 654912
        %v2410 = vsel %vm2409, %v2408, %v2403
        %v2411 = vadd.s32 %v1253, 4294967216
        %v2412 = vlaneseq
        %v2413 = vshrl.u32 %v2412, 7
        %v2414 = vsub.s32 %v2411, %v2413
        %v2415 = vrot.slane %v1984, %v2414
        %vm2416 = vcmask 720512
        %v2417 = vsel %vm2416, %v2415, %v2410
        %v2418 = vadd.s32 %v1253, 4294967208
        %v2419 = vlaneseq
        %v2420 = vshrl.u32 %v2419, 7
        %v2421 = vsub.s32 %v2418, %v2420
        %v2422 = vrot.slane %v1987, %v2421
        %vm2423 = vcmask 786112
        %v2424 = vsel %vm2423, %v2422, %v2417
        %v2425 = vlaneseq
        %v2426 = vshrl.u32 %v2425, 7
        %v2427 = vsub.s32 %v2399, %v2426
        %v2428 = vrot.slane %v1990, %v2427
        %v2429 = vlaneseq
        %v2430 = vshrl.u32 %v2429, 7
        %v2431 = vsub.s32 %v2404, %v2430
        %v2432 = vrot.slane %v1993, %v2431
        %v2433 = vsel %vm2409, %v2432, %v2428
        %v2434 = vlaneseq
        %v2435 = vshrl.u32 %v2434, 7
        %v2436 = vsub.s32 %v2411, %v2435
        %v2437 = vrot.slane %v1996, %v2436
        %v2438 = vsel %vm2416, %v2437, %v2433
        %v2439 = vlaneseq
        %v2440 = vshrl.u32 %v2439, 7
        %v2441 = vsub.s32 %v2418, %v2440
        %v2442 = vrot.slane %v1999, %v2441
        %v2443 = vsel %vm2423, %v2442, %v2438
        %v2444 = vlaneseq
        %v2445 = vshrl.u32 %v2444, 7
        %v2446 = vsub.s32 %v2399, %v2445
        %v2447 = vrot.slane %v2002, %v2446
        %v2448 = vlaneseq
        %v2449 = vshrl.u32 %v2448, 7
        %v2450 = vsub.s32 %v2404, %v2449
        %v2451 = vrot.slane %v2005, %v2450
        %v2452 = vsel %vm2409, %v2451, %v2447
        %v2453 = vlaneseq
        %v2454 = vshrl.u32 %v2453, 7
        %v2455 = vsub.s32 %v2411, %v2454
        %v2456 = vrot.slane %v2008, %v2455
        %v2457 = vsel %vm2416, %v2456, %v2452
        %v2458 = vlaneseq
        %v2459 = vshrl.u32 %v2458, 7
        %v2460 = vsub.s32 %v2418, %v2459
        %v2461 = vrot.slane %v2011, %v2460
        %v2462 = vsel %vm2423, %v2461, %v2457
        %v2463 = vlaneseq
        %v2464 = vshrl.u32 %v2463, 7
        %v2465 = vsub.s32 %v2399, %v2464
        %v2466 = vrot.slane %v2014, %v2465
        %v2467 = vlaneseq
        %v2468 = vshrl.u32 %v2467, 7
        %v2469 = vsub.s32 %v2404, %v2468
        %v2470 = vrot.slane %v2017, %v2469
        %v2471 = vsel %vm2409, %v2470, %v2466
        %v2472 = vlaneseq
        %v2473 = vshrl.u32 %v2472, 7
        %v2474 = vsub.s32 %v2411, %v2473
        %v2475 = vrot.slane %v2020, %v2474
        %v2476 = vsel %vm2416, %v2475, %v2471
        %v2477 = vlaneseq
        %v2478 = vshrl.u32 %v2477, 7
        %v2479 = vsub.s32 %v2418, %v2478
        %v2480 = vrot.slane %v2023, %v2479
        %v2481 = vsel %vm2423, %v2480, %v2476
        %v2482 = vlaneseq
        %v2483 = vshrl.u32 %v2482, 7
        %v2484 = vsub.s32 %v2399, %v2483
        %v2485 = vrot.slane %v2026, %v2484
        %v2486 = vlaneseq
        %v2487 = vshrl.u32 %v2486, 7
        %v2488 = vsub.s32 %v2404, %v2487
        %v2489 = vrot.slane %v2029, %v2488
        %v2490 = vsel %vm2409, %v2489, %v2485
        %v2491 = vlaneseq
        %v2492 = vshrl.u32 %v2491, 7
        %v2493 = vsub.s32 %v2411, %v2492
        %v2494 = vrot.slane %v2032, %v2493
        %v2495 = vsel %vm2416, %v2494, %v2490
        %v2496 = vlaneseq
        %v2497 = vshrl.u32 %v2496, 7
        %v2498 = vsub.s32 %v2418, %v2497
        %v2499 = vrot.slane %v2035, %v2498
        %v2500 = vsel %vm2423, %v2499, %v2495
        %v2501 = vlaneseq
        %v2502 = vshrl.u32 %v2501, 7
        %v2503 = vsub.s32 %v2399, %v2502
        %v2504 = vrot.slane %v2038, %v2503
        %v2505 = vlaneseq
        %v2506 = vshrl.u32 %v2505, 7
        %v2507 = vsub.s32 %v2404, %v2506
        %v2508 = vrot.slane %v2041, %v2507
        %v2509 = vsel %vm2409, %v2508, %v2504
        %v2510 = vlaneseq
        %v2511 = vshrl.u32 %v2510, 7
        %v2512 = vsub.s32 %v2411, %v2511
        %v2513 = vrot.slane %v2044, %v2512
        %v2514 = vsel %vm2416, %v2513, %v2509
        %v2515 = vlaneseq
        %v2516 = vshrl.u32 %v2515, 7
        %v2517 = vsub.s32 %v2418, %v2516
        %v2518 = vrot.slane %v2047, %v2517
        %v2519 = vsel %vm2423, %v2518, %v2514
        %v2520 = vlaneseq
        %v2521 = vshrl.u32 %v2520, 7
        %v2522 = vsub.s32 %v2399, %v2521
        %v2523 = vrot.slane %v2050, %v2522
        %v2524 = vlaneseq
        %v2525 = vshrl.u32 %v2524, 7
        %v2526 = vsub.s32 %v2404, %v2525
        %v2527 = vrot.slane %v2053, %v2526
        %v2528 = vsel %vm2409, %v2527, %v2523
        %v2529 = vlaneseq
        %v2530 = vshrl.u32 %v2529, 7
        %v2531 = vsub.s32 %v2411, %v2530
        %v2532 = vrot.slane %v2056, %v2531
        %v2533 = vsel %vm2416, %v2532, %v2528
        %v2534 = vlaneseq
        %v2535 = vshrl.u32 %v2534, 7
        %v2536 = vsub.s32 %v2418, %v2535
        %v2537 = vrot.slane %v2059, %v2536
        %v2538 = vsel %vm2423, %v2537, %v2533
        %v2539 = vlaneseq
        %v2540 = vshrl.u32 %v2539, 7
        %v2541 = vsub.s32 %v2399, %v2540
        %v2542 = vrot.slane %v2062, %v2541
        %v2543 = vlaneseq
        %v2544 = vshrl.u32 %v2543, 7
        %v2545 = vsub.s32 %v2404, %v2544
        %v2546 = vrot.slane %v2065, %v2545
        %v2547 = vsel %vm2409, %v2546, %v2542
        %v2548 = vlaneseq
        %v2549 = vshrl.u32 %v2548, 7
        %v2550 = vsub.s32 %v2411, %v2549
        %v2551 = vrot.slane %v2068, %v2550
        %v2552 = vsel %vm2416, %v2551, %v2547
        %v2553 = vlaneseq
        %v2554 = vshrl.u32 %v2553, 7
        %v2555 = vsub.s32 %v2418, %v2554
        %v2556 = vrot.slane %v2071, %v2555
        %v2557 = vsel %vm2423, %v2556, %v2552
        %v2558 = vsel %vm1412, %v2443, %v2424
        %v2559 = vsel %vm1414, %v2462, %v2558
        %v2560 = vsel %vm1416, %v2481, %v2559
        %v2561 = vsel %vm1418, %v2500, %v2560
        %v2562 = vsel %vm1420, %v2519, %v2561
        %v2563 = vsel %vm1422, %v2538, %v2562
        %v2564 = vsel %vm1424, %v2557, %v2563
        %v2566 = vadd.s32 %v1253, 4294967200
        %v2567 = vlaneseq
        %v2568 = vshrl.u32 %v2567, 7
        %v2569 = vsub.s32 %v2566, %v2568
        %v2570 = vrot.slane %v1978, %v2569
        %v2571 = vadd.s32 %v1253, 4294967192
        %v2572 = vlaneseq
        %v2573 = vshrl.u32 %v2572, 7
        %v2574 = vsub.s32 %v2571, %v2573
        %v2575 = vrot.slane %v1981, %v2574
        %vm2576 = vcmask 917312
        %v2577 = vsel %vm2576, %v2575, %v2570
        %v2578 = vadd.s32 %v1253, 4294967184
        %v2579 = vlaneseq
        %v2580 = vshrl.u32 %v2579, 7
        %v2581 = vsub.s32 %v2578, %v2580
        %v2582 = vrot.slane %v1984, %v2581
        %vm2583 = vcmask 982912
        %v2584 = vsel %vm2583, %v2582, %v2577
        %v2585 = vadd.s32 %v1253, 4294967176
        %v2586 = vlaneseq
        %v2587 = vshrl.u32 %v2586, 7
        %v2588 = vsub.s32 %v2585, %v2587
        %v2589 = vrot.slane %v1987, %v2588
        %vm2590 = vcmask 1048512
        %v2591 = vsel %vm2590, %v2589, %v2584
        %v2592 = vlaneseq
        %v2593 = vshrl.u32 %v2592, 7
        %v2594 = vsub.s32 %v2566, %v2593
        %v2595 = vrot.slane %v1990, %v2594
        %v2596 = vlaneseq
        %v2597 = vshrl.u32 %v2596, 7
        %v2598 = vsub.s32 %v2571, %v2597
        %v2599 = vrot.slane %v1993, %v2598
        %v2600 = vsel %vm2576, %v2599, %v2595
        %v2601 = vlaneseq
        %v2602 = vshrl.u32 %v2601, 7
        %v2603 = vsub.s32 %v2578, %v2602
        %v2604 = vrot.slane %v1996, %v2603
        %v2605 = vsel %vm2583, %v2604, %v2600
        %v2606 = vlaneseq
        %v2607 = vshrl.u32 %v2606, 7
        %v2608 = vsub.s32 %v2585, %v2607
        %v2609 = vrot.slane %v1999, %v2608
        %v2610 = vsel %vm2590, %v2609, %v2605
        %v2611 = vlaneseq
        %v2612 = vshrl.u32 %v2611, 7
        %v2613 = vsub.s32 %v2566, %v2612
        %v2614 = vrot.slane %v2002, %v2613
        %v2615 = vlaneseq
        %v2616 = vshrl.u32 %v2615, 7
        %v2617 = vsub.s32 %v2571, %v2616
        %v2618 = vrot.slane %v2005, %v2617
        %v2619 = vsel %vm2576, %v2618, %v2614
        %v2620 = vlaneseq
        %v2621 = vshrl.u32 %v2620, 7
        %v2622 = vsub.s32 %v2578, %v2621
        %v2623 = vrot.slane %v2008, %v2622
        %v2624 = vsel %vm2583, %v2623, %v2619
        %v2625 = vlaneseq
        %v2626 = vshrl.u32 %v2625, 7
        %v2627 = vsub.s32 %v2585, %v2626
        %v2628 = vrot.slane %v2011, %v2627
        %v2629 = vsel %vm2590, %v2628, %v2624
        %v2630 = vlaneseq
        %v2631 = vshrl.u32 %v2630, 7
        %v2632 = vsub.s32 %v2566, %v2631
        %v2633 = vrot.slane %v2014, %v2632
        %v2634 = vlaneseq
        %v2635 = vshrl.u32 %v2634, 7
        %v2636 = vsub.s32 %v2571, %v2635
        %v2637 = vrot.slane %v2017, %v2636
        %v2638 = vsel %vm2576, %v2637, %v2633
        %v2639 = vlaneseq
        %v2640 = vshrl.u32 %v2639, 7
        %v2641 = vsub.s32 %v2578, %v2640
        %v2642 = vrot.slane %v2020, %v2641
        %v2643 = vsel %vm2583, %v2642, %v2638
        %v2644 = vlaneseq
        %v2645 = vshrl.u32 %v2644, 7
        %v2646 = vsub.s32 %v2585, %v2645
        %v2647 = vrot.slane %v2023, %v2646
        %v2648 = vsel %vm2590, %v2647, %v2643
        %v2649 = vlaneseq
        %v2650 = vshrl.u32 %v2649, 7
        %v2651 = vsub.s32 %v2566, %v2650
        %v2652 = vrot.slane %v2026, %v2651
        %v2653 = vlaneseq
        %v2654 = vshrl.u32 %v2653, 7
        %v2655 = vsub.s32 %v2571, %v2654
        %v2656 = vrot.slane %v2029, %v2655
        %v2657 = vsel %vm2576, %v2656, %v2652
        %v2658 = vlaneseq
        %v2659 = vshrl.u32 %v2658, 7
        %v2660 = vsub.s32 %v2578, %v2659
        %v2661 = vrot.slane %v2032, %v2660
        %v2662 = vsel %vm2583, %v2661, %v2657
        %v2663 = vlaneseq
        %v2664 = vshrl.u32 %v2663, 7
        %v2665 = vsub.s32 %v2585, %v2664
        %v2666 = vrot.slane %v2035, %v2665
        %v2667 = vsel %vm2590, %v2666, %v2662
        %v2668 = vlaneseq
        %v2669 = vshrl.u32 %v2668, 7
        %v2670 = vsub.s32 %v2566, %v2669
        %v2671 = vrot.slane %v2038, %v2670
        %v2672 = vlaneseq
        %v2673 = vshrl.u32 %v2672, 7
        %v2674 = vsub.s32 %v2571, %v2673
        %v2675 = vrot.slane %v2041, %v2674
        %v2676 = vsel %vm2576, %v2675, %v2671
        %v2677 = vlaneseq
        %v2678 = vshrl.u32 %v2677, 7
        %v2679 = vsub.s32 %v2578, %v2678
        %v2680 = vrot.slane %v2044, %v2679
        %v2681 = vsel %vm2583, %v2680, %v2676
        %v2682 = vlaneseq
        %v2683 = vshrl.u32 %v2682, 7
        %v2684 = vsub.s32 %v2585, %v2683
        %v2685 = vrot.slane %v2047, %v2684
        %v2686 = vsel %vm2590, %v2685, %v2681
        %v2687 = vlaneseq
        %v2688 = vshrl.u32 %v2687, 7
        %v2689 = vsub.s32 %v2566, %v2688
        %v2690 = vrot.slane %v2050, %v2689
        %v2691 = vlaneseq
        %v2692 = vshrl.u32 %v2691, 7
        %v2693 = vsub.s32 %v2571, %v2692
        %v2694 = vrot.slane %v2053, %v2693
        %v2695 = vsel %vm2576, %v2694, %v2690
        %v2696 = vlaneseq
        %v2697 = vshrl.u32 %v2696, 7
        %v2698 = vsub.s32 %v2578, %v2697
        %v2699 = vrot.slane %v2056, %v2698
        %v2700 = vsel %vm2583, %v2699, %v2695
        %v2701 = vlaneseq
        %v2702 = vshrl.u32 %v2701, 7
        %v2703 = vsub.s32 %v2585, %v2702
        %v2704 = vrot.slane %v2059, %v2703
        %v2705 = vsel %vm2590, %v2704, %v2700
        %v2706 = vlaneseq
        %v2707 = vshrl.u32 %v2706, 7
        %v2708 = vsub.s32 %v2566, %v2707
        %v2709 = vrot.slane %v2062, %v2708
        %v2710 = vlaneseq
        %v2711 = vshrl.u32 %v2710, 7
        %v2712 = vsub.s32 %v2571, %v2711
        %v2713 = vrot.slane %v2065, %v2712
        %v2714 = vsel %vm2576, %v2713, %v2709
        %v2715 = vlaneseq
        %v2716 = vshrl.u32 %v2715, 7
        %v2717 = vsub.s32 %v2578, %v2716
        %v2718 = vrot.slane %v2068, %v2717
        %v2719 = vsel %vm2583, %v2718, %v2714
        %v2720 = vlaneseq
        %v2721 = vshrl.u32 %v2720, 7
        %v2722 = vsub.s32 %v2585, %v2721
        %v2723 = vrot.slane %v2071, %v2722
        %v2724 = vsel %vm2590, %v2723, %v2719
        %v2725 = vsel %vm1412, %v2610, %v2591
        %v2726 = vsel %vm1414, %v2629, %v2725
        %v2727 = vsel %vm1416, %v2648, %v2726
        %v2728 = vsel %vm1418, %v2667, %v2727
        %v2729 = vsel %vm1420, %v2686, %v2728
        %v2730 = vsel %vm1422, %v2705, %v2729
        %v2731 = vsel %vm1424, %v2724, %v2730
        %v2733 = vsel %vm1427, %v2230, %v2397
        %vm2734 = vcmask 523264
        %v2735 = vsel %vm2734, %v2733, %v2564
        %vm2736 = vcmask 785408
        %v2737 = vsel %vm2736, %v2735, %v2731
        %v2738 = vsel %vm1942, %v2737, 0.0
        %v2739 = vsel %vm1943, %v2737, 0.0
        %2740 = vmatprep.subr.mxu0 0.0
        %2741 = vmatpush1.msra.mxu0 %v464
        %2742 = vmatprep.subr.mxu0 0.0
        %2743 = vmatpush1.msra.mxu0 %v463
        %2744 = vmatprep.subr.mxu0 0.0
        %2745 = vmatpush1.msra.mxu0 %v462
        %2746 = vmatprep.subr.mxu0 0.0
        %2747 = vmatpush1.msra.mxu0 %v461
        %2748 = vmatprep.subr.mxu0 0.0
        %2749 = vmatpush1.msra.mxu0 %v460
        %2750 = vmatprep.subr.mxu0 0.0
        %2751 = vmatpush1.msra.mxu0 %v459
        %2752 = vmatprep.subr.mxu0 0.0
        %2753 = vmatpush1.msra.mxu0 %v458
        %2754 = vmatprep.subr.mxu0 0.0
        %2755 = vmatpush1.msra.mxu0 %v457
        %2756 = vmatprep.subr.mxu0 0.0
        %2757 = vmatpush1.msra.mxu0 %v456
        %2758 = vmatprep.subr.mxu0 0.0
        %2759 = vmatpush1.msra.mxu0 %v455
        %2760 = vmatprep.subr.mxu0 0.0
        %2761 = vmatpush1.msra.mxu0 %v454
        %2762 = vmatprep.subr.mxu0 0.0
        %2763 = vmatpush1.msra.mxu0 %v453
        %2764 = vmatprep.subr.mxu0 0.0
        %2765 = vmatpush1.msra.mxu0 %v452
        %2766 = vmatprep.subr.mxu0 0.0
        %2767 = vmatpush1.msra.mxu0 %v451
        %2768 = vmatprep.subr.mxu0 0.0
        %2769 = vmatpush1.msra.mxu0 %v450
        %2770 = vmatprep.subr.mxu0 0.0
        %2771 = vmatpush1.msra.mxu0 %v449
        %2772 = vmatprep.subr.mxu0 0.0
        %2773 = vmatpush2.msra.mxu0 %v480
        %2774 = vmatprep.subr.mxu0 0.0
        %2775 = vmatpush2.msra.mxu0 %v479
        %2776 = vmatprep.subr.mxu0 0.0
        %2777 = vmatpush2.msra.mxu0 %v478
        %2778 = vmatprep.subr.mxu0 0.0
        %2779 = vmatpush2.msra.mxu0 %v477
        %2780 = vmatprep.subr.mxu0 0.0
        %2781 = vmatpush2.msra.mxu0 %v476
        %2782 = vmatprep.subr.mxu0 0.0
        %2783 = vmatpush2.msra.mxu0 %v475
        %2784 = vmatprep.subr.mxu0 0.0
        %2785 = vmatpush2.msra.mxu0 %v474
        %2786 = vmatprep.subr.mxu0 0.0
        %2787 = vmatpush2.msra.mxu0 %v473
        %2788 = vmatprep.subr.mxu0 0.0
        %2789 = vmatpush2.msra.mxu0 %v472
        %2790 = vmatprep.subr.mxu0 0.0
        %2791 = vmatpush2.msra.mxu0 %v471
        %2792 = vmatprep.subr.mxu0 0.0
        %2793 = vmatpush2.msra.mxu0 %v470
        %2794 = vmatprep.subr.mxu0 0.0
        %2795 = vmatpush2.msra.mxu0 %v469
        %2796 = vmatprep.subr.mxu0 0.0
        %2797 = vmatpush2.msra.mxu0 %v468
        %2798 = vmatprep.subr.mxu0 0.0
        %2799 = vmatpush2.msra.mxu0 %v467
        %2800 = vmatprep.subr.mxu0 0.0
        %2801 = vmatpush2.msra.mxu0 %v466
        %2802 = vmatprep.subr.mxu0 0.0
        %2803 = vmatpush2.msra.mxu0 %v465
        %2804 = vmatprep.mubr.f32.mxu0 %v2739
        %2805 = vmatmul.mubr.f32.gmra.mxu0 %v2738
        %v2806 = vpop.f32.mrf.mxu0
        %v2807 = vadd.f32 0.0, %v2806
        %v2808 = vpop.f32.mrf.mxu0
        %2809 = vdwg.mxu0
        %v2810 = vpack.c.bf16 %v2807, %v2807
        %v2811 = vld [vmem:[#allocation9] sm:$0xf]
        %v2812 = vld [vmem:[#allocation9 + $0x4] sm:$0xf]
        %v2813 = vld [vmem:[#allocation9 + $0x8] sm:$0xf]
        %v2814 = vld [vmem:[#allocation9 + $0xc] sm:$0xf]
        %v2815 = vld [vmem:[#allocation9 + $0x10] sm:$0xf]
        %v2816 = vld [vmem:[#allocation9 + $0x14] sm:$0xf]
        %v2817 = vld [vmem:[#allocation9 + $0x18] sm:$0xf]
        %v2818 = vld [vmem:[#allocation9 + $0x1c] sm:$0xf]
        %v2819 = vld [vmem:[#allocation9 + $0x20] sm:$0xf]
        %v2820 = vld [vmem:[#allocation9 + $0x24] sm:$0xf]
        %v2821 = vld [vmem:[#allocation9 + $0x28] sm:$0xf]
        %v2822 = vld [vmem:[#allocation9 + $0x2c] sm:$0xf]
        %v2823 = vld [vmem:[#allocation9 + $0x30] sm:$0xf]
        %v2824 = vld [vmem:[#allocation9 + $0x34] sm:$0xf]
        %v2825 = vld [vmem:[#allocation9 + $0x38] sm:$0xf]
        %v2826 = vld [vmem:[#allocation9 + $0x3c] sm:$0xf]
        %v2827 = vld [vmem:[%s7] sm:$0x1]
        %v2829 = vlaneseq
        %v2830 = vshrl.u32 %v2829, 7
        %v2831 = vsub.s32 0, %v2830
        %v2832 = vrot.slane %v2827, %v2831
        %v2850 = vunpack.c.l.b16 %v2811
        %v2851 = vunpack.c.l.b16 %v2812
        %v2852 = vunpack.c.l.b16 %v2813
        %v2853 = vunpack.c.l.b16 %v2814
        %v2854 = vunpack.c.l.b16 %v2815
        %v2855 = vunpack.c.l.b16 %v2816
        %v2856 = vunpack.c.l.b16 %v2817
        %v2857 = vunpack.c.l.b16 %v2818
        %v2858 = vunpack.c.l.b16 %v2819
        %v2859 = vunpack.c.l.b16 %v2820
        %v2860 = vunpack.c.l.b16 %v2821
        %v2861 = vunpack.c.l.b16 %v2822
        %v2862 = vunpack.c.l.b16 %v2823
        %v2863 = vunpack.c.l.b16 %v2824
        %v2864 = vunpack.c.l.b16 %v2825
        %v2865 = vunpack.c.l.b16 %v2826
        %v2866 = vpack.c.b16 %v2851, %v2850
        %v2867 = vpack.c.b16 %v2853, %v2852
        %v2868 = vpack.c.b16 %v2855, %v2854
        %v2869 = vpack.c.b16 %v2857, %v2856
        %v2870 = vpack.c.b16 %v2859, %v2858
        %v2871 = vpack.c.b16 %v2861, %v2860
        %v2872 = vpack.c.b16 %v2863, %v2862
        %v2873 = vpack.c.b16 %v2865, %v2864
        %2882 = vmatprep.subr.bf16.mxu0 0
        %2883 = vmatpush1.bf16.msra.mxu0 %v2873
        %2884 = vmatprep.subr.bf16.mxu0 0
        %2885 = vmatpush1.bf16.msra.mxu0 %v2872
        %2886 = vmatprep.subr.bf16.mxu0 0
        %2887 = vmatpush1.bf16.msra.mxu0 %v2871
        %2888 = vmatprep.subr.bf16.mxu0 0
        %2889 = vmatpush1.bf16.msra.mxu0 %v2870
        %2890 = vmatprep.subr.bf16.mxu0 0
        %2891 = vmatpush1.bf16.msra.mxu0 %v2869
        %2892 = vmatprep.subr.bf16.mxu0 0
        %2893 = vmatpush1.bf16.msra.mxu0 %v2868
        %2894 = vmatprep.subr.bf16.mxu0 0
        %2895 = vmatpush1.bf16.msra.mxu0 %v2867
        %2896 = vmatprep.subr.bf16.mxu0 0
        %2897 = vmatpush1.bf16.msra.mxu0 %v2866
        %2898 = vmatprep.subr.bf16.mxu0 0
        %2899 = vmatpush2.bf16.msra.mxu0 0
        %2900 = vmatprep.subr.bf16.mxu0 0
        %2901 = vmatpush2.bf16.msra.mxu0 0
        %2902 = vmatprep.subr.bf16.mxu0 0
        %2903 = vmatpush2.bf16.msra.mxu0 0
        %2904 = vmatprep.subr.bf16.mxu0 0
        %2905 = vmatpush2.bf16.msra.mxu0 0
        %2906 = vmatprep.subr.bf16.mxu0 0
        %2907 = vmatpush2.bf16.msra.mxu0 0
        %2908 = vmatprep.subr.bf16.mxu0 0
        %2909 = vmatpush2.bf16.msra.mxu0 0
        %2910 = vmatprep.subr.bf16.mxu0 0
        %2911 = vmatpush2.bf16.msra.mxu0 0
        %2912 = vmatprep.subr.bf16.mxu0 0
        %2913 = vmatpush2.bf16.msra.mxu0 0
        %2914 = vmatprep.mubr.bf16.mxu0 0
        %2915 = vmatmul.mubr.bf16.gmra.mxu0 %v2810
        %v2916 = vpop.f32.mrf.mxu0
        %v2917 = vadd.f32 %v2832, %v2916
        %v2918 = vpop.f32.mrf.mxu0
        %v2919 = vpop.f32.mrf.mxu0
        %v2920 = vpop.f32.mrf.mxu0
        %2921 = vdwg.mxu0
        %v2922 = vld [vmem:[%s8] sm:$0x1]
        %v2924 = vlaneseq
        %v2925 = vshrl.u32 %v2924, 7
        %v2926 = vsub.s32 0, %v2925
        %v2927 = vrot.slane %v2922, %v2926
        %v2929 = vmul.f32 %v2917, %v2927
        %v2930 = vld [vmem:[%s9] sm:$0x1]
        %v2932 = vlaneseq
        %v2933 = vshrl.u32 %v2932, 7
        %v2934 = vsub.s32 0, %v2933
        %v2935 = vrot.slane %v2930, %v2934
        %v2937 = vadd.f32 %v2929, %v2935
        %2938 = vst [vmem:[%s446] sm:$0xff] %v2937
        %s2939 = sand.u32 %s261, 1
        %s2940 = scalar_lea.sflag [#allocation5], %s2939
        %s2941 = sand.u32 %s261, 1
        %s2942 = smul.addr %s2941, 8
        %s2943 = scalar_lea.vmem [#allocation11], %s2942
        // Predicated region
        $region77: #{tpu_custom_call.1} parent=59 // pred_check
          %p2944 = pneg %p271
        $region78: #{tpu_custom_call.1} parent=59 // pred_check_branch
          %2946 = sbr.rel (%p2944) target = $region80
        $region79: #{tpu_custom_call.1} parent=59 // pred_region
          %s2948 = ssub.s32 128, 128
          %2949 = vsyncadd %s2940, %s2948
          %s2950 = smul.addr %s33, 128
          %s2951 = scalar_lea.hbm %s10, %s2950
          %s2953 = sshll.u32 %s2943, 4
          %s2954 = int_to_ptr.vmem [resolvable:$true] %s2953
          %2956 = dma.vmem_to_hbm [thread:$0]  %s2954, 128, %s2951, %s2940
        $region80: #{tpu_custom_call.1} parent=59 // pred_fallthru
          _
      $region60: #{tpu_custom_call.1} parent=5 // pred_fallthru
        _
      %p2957 = scmp.le.s32.totalorder 2, %s28
      // Predicated region
      $region81: #{tpu_custom_call.1} parent=5 // pred_check
        %p2958 = pneg %p2957
      $region82: #{tpu_custom_call.1} parent=5 // pred_check_branch
        %2960 = sbr.rel (%p2958) target = $region84
      $region83: #{tpu_custom_call.1} parent=5 // pred_region
        %s2961 = ssub.s32 %s28, 2
        // Predicated region
        $region85: #{tpu_custom_call.1} parent=83 // pred_check
          %p2962 = pneg %p277
        $region86: #{tpu_custom_call.1} parent=83 // pred_check_branch
          %2964 = sbr.rel (%p2962) target = $region88
        $region87: #{tpu_custom_call.1} parent=83 // pred_region
          %s2965 = sand.u32 %s262, 1
          %s2966 = scalar_lea.sflag [#allocation5], %s2965
          %s2967 = sand.u32 %s262, 1
          %s2968 = smul.addr %s2967, 8
          %s2969 = scalar_lea.vmem [#allocation11], %s2968
          %2970 = dma.done %s2966, 128
        $region88: #{tpu_custom_call.1} parent=83 // pred_fallthru
          _
      $region84: #{tpu_custom_call.1} parent=5 // pred_fallthru
        _
    $region6: #{tpu_custom_call.1} parent=1 // loop_footer
      %s32 = sadd.s32 1, %s28
    $region7: #{tpu_custom_call.1} parent=1 // loop_footer_branch
      %27 = sbr.rel target = $region3
    $region8: #{tpu_custom_call.1} parent=1 // loop_exit
      _
    %2971 = vsyncpa [#allocation4], 1
    %s2972 = scalar_lea.sflag [#allocation4], 1
    %2973 = vsyncpa %s2972, 1
    %2974 = vsyncpa [#allocation7], 1
    %s2975 = scalar_lea.sflag [#allocation7], 1
    %2976 = vsyncpa %s2975, 1
    %2977 = vsyncpa [#allocation10], 1
    %2978 = vsyncpa [#allocation5], 1
    %s2979 = scalar_lea.sflag [#allocation5], 1
    %2980 = vsyncpa %s2979, 1

</llo_original>
